<compile_context>
chip_gen: v7x
topology: tpu7x:2x2x1
jax: 0.10.0
libtpu: 0.0.40
codegen_flags: <defaults>
</compile_context>

<pallas_src>
import functools

import jax
import jax.numpy as jnp
from jax.experimental import pallas as pl
from jax.experimental.pallas import tpu as pltpu


# ---------------------------------------------------------------------------
# Kernel
# ---------------------------------------------------------------------------
def ema_kernel(h, w, cg, roll_mode, x_ref, w1_ref, w3_ref, prm_ref, ex_ref,
               msk_ref, g_ref, out_ref, tap_ref):
    f32 = jnp.float32
    bf16 = jnp.bfloat16
    x = x_ref[...].astype(f32)                       # (n, hw), n = tbg*cg
    n, hw = x.shape

    b1 = prm_ref[:, 0:1].astype(f32)                 # packed per-channel params
    b3 = prm_ref[:, 1:2].astype(f32)
    gnw = prm_ref[:, 2:3].astype(f32)
    gnb = prm_ref[:, 3:4].astype(f32)

    ex = ex_ref[...]                                 # (2*(h+w), hw) f32
    pool_rows = ex[:h + w]                           # one-hots pre-scaled by 1/w, 1/h
    e_h = ex[h + w:2 * h + w]                        # unscaled row one-hots (h, hw)
    e_w = ex[2 * h + w:]                             # unscaled col one-hots (w, hw)

    # ---- directional average pools as one matmul: (n,hw) x (h+w,hw)^T -------
    pooled = jax.lax.dot_general(x, pool_rows, (((1,), (1,)), ((), ())),
                                 preferred_element_type=f32)        # (n, h+w)
    # shared 1x1 conv on concat([x_h, x_w]) == block-diagonal channel matmul
    hwc = jnp.dot(w1_ref[...], pooled, preferred_element_type=f32) + b1
    sig = jax.nn.sigmoid(hwc)
    gate = (jnp.dot(sig[:, :h], e_h, preferred_element_type=f32) *
            jnp.dot(sig[:, h:], e_w, preferred_element_type=f32))   # (n, hw)
    x1p = x * gate

    # ---- GroupNorm (num_groups == channels): per-row normalization over HW --
    mu = jnp.mean(x1p, axis=1, keepdims=True)
    var = jnp.mean(jnp.square(x1p - mu), axis=1, keepdims=True)
    x1 = (x1p - mu) * jax.lax.rsqrt(var + 1e-5) * gnw + gnb         # (n, hw)

    # ---- 3x3 conv, padding=1 -------------------------------------------------
    # Nine circular-shifted taps (XLU roll) are masked with precomputed 0/1
    # validity maps, staged in bf16 and contracted against the stacked
    # block-diagonal weight with ONE MXU matmul (f32 accumulation).
    def shifted(s):
        # out[:, p] = x[:, (p + s) mod hw]
        if s == 0:
            return x
        if roll_mode == "xlu+":          # pltpu.roll matches jnp.roll semantics
            return pltpu.roll(x, (-s) % hw, axis=1)
        if roll_mode == "xlu-":          # opposite rotation convention
            return pltpu.roll(x, s % hw, axis=1)
        return jnp.roll(x, -s, axis=1)   # fallback: lane slices + concat

    masks = msk_ref[...]                             # (9, hw) f32 in {0, 1}
    t = 0
    for dy in (-1, 0, 1):
        for dx in (-1, 0, 1):
            tap = shifted(dy * w + dx) * masks[t:t + 1]
            tap_ref[t * n:(t + 1) * n, :] = tap.astype(bf16)
            t += 1
    x2 = jnp.dot(w3_ref[...], tap_ref[...], preferred_element_type=f32) + b3

    # ---- global avg pool + per-group channel softmax + cross-branch mix -----
    gmat = g_ref[...]                                # (n, n) bf16 group indicator
    a12 = jnp.concatenate([jnp.mean(x1, axis=1, keepdims=True),
                           jnp.mean(x2, axis=1, keepdims=True)], axis=1)  # (n, 2)
    # subtract the per-group mean: softmax-invariant, and the per-group
    # denominator is >= exp(group_max - group_mean) >= 1 (no 0/0 underflow).
    gmean = jnp.dot(gmat, a12, preferred_element_type=f32) * (1.0 / cg)
    e12 = jnp.exp(a12 - gmean)
    d12 = jnp.dot(gmat, e12, preferred_element_type=f32)             # group sums
    s1 = e12[:, 0:1] / d12[:, 0:1]
    s2 = e12[:, 1:2] / d12[:, 1:2]
    # group-sum of s1*x2 + s2*x1, broadcast back to every channel row (bf16 MXU)
    mix = (s1 * x2 + s2 * x1).astype(bf16)
    wts = jnp.dot(gmat, mix, preferred_element_type=f32)
    out_ref[...] = (x * jax.nn.sigmoid(wts)).astype(out_ref.dtype)


# ---------------------------------------------------------------------------
# Host-side helpers
# ---------------------------------------------------------------------------
def _vmem_capacity_bytes():
    try:
        return int(pltpu.get_tpu_info().vmem_capacity_bytes)
    except Exception:
        return 64 << 20                      # conservative default (v7x per-TC)


def _block_bytes(t, cg, h, w, hw, in_bytes, out_bytes):
    """Rough per-grid-step VMEM footprint for tbg = t."""
    n = t * cg
    xio = 2 * n * hw * (in_bytes + out_bytes)      # double-buffered x / out blocks
    const = 2 * (n * n * 4                         # w1 block-diag (f32)
                 + n * 9 * n * 2                   # stacked 3x3 weight (bf16)
                 + n * 4 * 4                       # packed per-channel params
                 + 2 * (h + w) * hw * 4            # pooling / expansion one-hots
                 + 9 * hw * 4                      # conv validity masks
                 + n * n * 2)                      # same-group indicator (bf16)
    scratch = 9 * n * hw * 2                       # bf16 tap-staging scratch
    temps = 6 * n * hw * 4                         # ~6 live (n, hw) f32 temporaries
    return xio + const + scratch + temps


def _pick_tbg(bg, cg, h, w, hw, in_bytes, out_bytes, budget, n_cap=256):
    """Largest tbg (divisor of bg) whose block fits the VMEM budget, capped so
    n = tbg*cg stays near the MXU height (block-diagonal FLOPs grow as tbg^2),
    preferring grid >= 2 so DMA overlaps compute and the parallel grid axis can
    shard across both v7x TensorCores."""
    legal = [t for t in range(1, bg + 1)
             if bg % t == 0 and ((t * cg) % 8 == 0 or t == bg)]
    fitting = [t for t in legal
               if _block_bytes(t, cg, h, w, hw, in_bytes, out_bytes) <= budget]
    pool = fitting or [min(legal)]
    capped = [t for t in pool if t * cg <= n_cap] or pool
    multi = [t for t in capped if bg // t >= 2] or capped
    return max(multi)


@functools.lru_cache(maxsize=None)
def _roll_mode():
    """Probe pltpu.roll's rotation convention once (outside any jit trace) so
    the 3x3 tap shifts are correct either way; fall back to jnp.roll."""
    try:
        def probe(x_ref, o_ref):
            o_ref[...] = pltpu.roll(x_ref[...], 1, axis=1)
        xp = jnp.broadcast_to(jnp.arange(128, dtype=jnp.float32), (8, 128))
        out = pl.pallas_call(
            probe, out_shape=jax.ShapeDtypeStruct((8, 128), jnp.float32))(xp)
        return "xlu+" if float(out[0, 0]) > 64.0 else "xlu-"
    except Exception:
        return "concat"


@functools.partial(jax.jit,
                   static_argnames=("groups", "tbg", "roll_mode", "vmem_cap"))
def _ema_jit(x, w1, b1, w3, b3, gnw, gnb, *, groups, tbg, roll_mode, vmem_cap):
    b, c, h, w = x.shape
    cg = c // groups
    bg = b * groups
    hw = h * w
    n = tbg * cg
    grid = bg // tbg
    f32 = jnp.float32
    bf16 = jnp.bfloat16

    # lane-dense view: row = (group_instance, channel-in-group), col = h*w
    x_flat = x.reshape(bg * cg, hw)

    # block-diagonal weights (shared by the tbg group-instances in a block)
    eye = jnp.eye(tbg, dtype=f32)
    w1_bd = jnp.einsum('ab,oi->aobi', eye, w1.astype(f32)).reshape(n, n)
    w3_taps = jnp.transpose(w3.astype(f32), (2, 3, 0, 1)).reshape(9, cg, cg)
    w3_bd = jnp.einsum('ab,toi->taobi', eye, w3_taps).reshape(9, n, n)
    # stacked along the contraction axis -> one (n, 9n) bf16 MXU operand
    w3_stack = jnp.transpose(w3_bd, (1, 0, 2)).reshape(n, 9 * n).astype(bf16)

    # packed per-channel params: columns = [b1, b3, gn_weight, gn_bias]
    prm = jnp.tile(jnp.stack([b1, b3, gnw, gnb], axis=1).astype(f32), (tbg, 1))

    # pooling rows (1/w, 1/h scales folded in) + unscaled expansion rows
    p = jnp.arange(hw)
    row = p // w
    col = p % w
    e_h = (row[None, :] == jnp.arange(h)[:, None]).astype(f32)      # (h, hw)
    e_w = (col[None, :] == jnp.arange(w)[:, None]).astype(f32)      # (w, hw)
    ex = jnp.concatenate([e_h / w, e_w / h, e_h, e_w], axis=0)      # (2h+2w, hw)

    # per-tap validity masks for the rolled 3x3 taps (padding=1 semantics)
    mask_rows = []
    for dy in (-1, 0, 1):
        for dx in (-1, 0, 1):
            m = jnp.ones((hw,), f32)
            if dy == -1:
                m = m * (row != 0).astype(f32)
            elif dy == 1:
                m = m * (row != h - 1).astype(f32)
            if dx == -1:
                m = m * (col != 0).astype(f32)
            elif dx == 1:
                m = m * (col != w - 1).astype(f32)
            mask_rows.append(m)
    msk = jnp.stack(mask_rows, axis=0)                              # (9, hw)

    gid = jnp.arange(n) // cg
    gmat = (gid[:, None] == gid[None, :]).astype(bf16)              # (n, n)

    est = _block_bytes(tbg, cg, h, w, hw, x.dtype.itemsize, x.dtype.itemsize)
    vmem_limit = int(min(vmem_cap // 2, max(32 << 20, est + (8 << 20))))

    out_flat = pl.pallas_call(
        functools.partial(ema_kernel, h, w, cg, roll_mode),
        out_shape=jax.ShapeDtypeStruct((bg * cg, hw), x.dtype),
        grid=(grid,),
        in_specs=[
            pl.BlockSpec((n, hw), lambda i: (i, 0)),
            pl.BlockSpec((n, n), lambda i: (0, 0)),
            pl.BlockSpec((n, 9 * n), lambda i: (0, 0)),
            pl.BlockSpec((n, 4), lambda i: (0, 0)),
            pl.BlockSpec((2 * (h + w), hw), lambda i: (0, 0)),
            pl.BlockSpec((9, hw), lambda i: (0, 0)),
            pl.BlockSpec((n, n), lambda i: (0, 0)),
        ],
        out_specs=pl.BlockSpec((n, hw), lambda i: (i, 0)),
        scratch_shapes=[pltpu.VMEM((9 * n, hw), bf16)],
        compiler_params=pltpu.CompilerParams(
            dimension_semantics=("parallel",),
            vmem_limit_bytes=vmem_limit),
    )(x_flat, w1_bd, w3_stack, prm, ex, msk, gmat)
    return out_flat.reshape(b, c, h, w)


def ema_forward(x, w1, b1, w3, b3, gnw, gnb, *, groups):
    b, c, h, w = x.shape
    assert c % groups == 0 and (c // groups) > 0
    hw = h * w
    # lane-dense layout requires the flattened spatial axis to be 128-aligned
    # TODO(synk): pad h*w (and mask pooling / means / tap masks) when h*w is not
    # a multiple of 128 so the output stays lane-dense for unmasked stores.
    assert hw % 128 == 0, "h*w must be a multiple of 128 for this kernel"
    cg = c // groups
    bg = b * groups
    vmem_cap = _vmem_capacity_bytes()
    budget = min(int(0.35 * vmem_cap), 48 << 20)
    tbg = _pick_tbg(bg, cg, h, w, hw, x.dtype.itemsize, x.dtype.itemsize, budget)
    return _ema_jit(x, w1, b1, w3, b3, gnw, gnb, groups=groups, tbg=tbg,
                    roll_mode=_roll_mode(), vmem_cap=vmem_cap)


# ---------------------------------------------------------------------------
# Pure-JAX reference (matches the PyTorch forward semantics)
# ---------------------------------------------------------------------------
def ema_reference(x, w1, b1, w3, b3, gnw, gnb, groups, eps=1e-5):
    hp = jax.lax.Precision.HIGHEST
    b, c, h, w = x.shape
    cg = c // groups
    gx = x.reshape(b * groups, cg, h, w).astype(jnp.float32)
    x_h = gx.mean(3)                                        # (bg, cg, h)
    x_w = gx.mean(2)                                        # (bg, cg, w)
    pooled = jnp.concatenate([x_h, x_w], axis=2)            # (bg, cg, h+w)
    hwc = jnp.einsum('oi,bis->bos', w1, pooled, precision=hp) + b1[None, :, None]
    sh = jax.nn.sigmoid(hwc[:, :, :h])
    sw = jax.nn.sigmoid(hwc[:, :, h:])
    x1p = gx * sh[:, :, :, None] * sw[:, :, None, :]
    mu = x1p.mean((2, 3), keepdims=True)
    var = ((x1p - mu) ** 2).mean((2, 3), keepdims=True)
    x1 = ((x1p - mu) / jnp.sqrt(var + eps) * gnw[None, :, None, None]
          + gnb[None, :, None, None])
    xpad = jnp.pad(gx, ((0, 0), (0, 0), (1, 1), (1, 1)))
    x2 = jnp.zeros_like(gx) + b3[None, :, None, None]
    for ky in range(3):
        for kx in range(3):
            x2 = x2 + jnp.einsum('oi,bihw->bohw', w3[:, :, ky, kx],
                                 xpad[:, :, ky:ky + h, kx:kx + w], precision=hp)
    a1 = x1.mean((2, 3))
    a2 = x2.mean((2, 3))
    s1 = jax.nn.softmax(a1, axis=-1)
    s2 = jax.nn.softmax(a2, axis=-1)
    wts = (jnp.einsum('bc,bchw->bhw', s1, x2, precision=hp) +
           jnp.einsum('bc,bchw->bhw', s2, x1, precision=hp))
    out = gx * jax.nn.sigmoid(wts)[:, None]
    return out.reshape(b, c, h, w).astype(x.dtype)


if __name__ == "__main__":
    B, C, H, W = 2, 16, 16, 16
    FACTOR = 4                     # groups; cg = C // FACTOR = 4, bg = B*FACTOR = 8
    cg = C // FACTOR

    key = jax.random.PRNGKey(0)
    kx, k1, k2, k3, k4, k5, k6 = jax.random.split(key, 7)
    x = jax.random.normal(kx, (B, C, H, W), jnp.float32)

    # PyTorch-shaped parameters: conv weights (out, in[, kh, kw]), biases (out,)
    w1 = jax.random.normal(k1, (cg, cg), jnp.float32) * 0.3       # conv1x1 weight
    b1 = jax.random.normal(k2, (cg,), jnp.float32) * 0.1          # conv1x1 bias
    w3 = jax.random.normal(k3, (cg, cg, 3, 3), jnp.float32) * 0.2  # conv3x3 weight
    b3 = jax.random.normal(k4, (cg,), jnp.float32) * 0.1           # conv3x3 bias
    gnw = 1.0 + 0.1 * jax.random.normal(k5, (cg,), jnp.float32)    # GroupNorm weight
    gnb = 0.1 * jax.random.normal(k6, (cg,), jnp.float32)          # GroupNorm bias

    out = ema_forward(x, w1, b1, w3, b3, gnw, gnb, groups=FACTOR)
    out = jax.block_until_ready(out)

    ref = ema_reference(x, w1, b1, w3, b3, gnw, gnb, FACTOR)
    assert out.shape == (B, C, H, W)
    err = float(jnp.max(jnp.abs(out - ref)))
    # tolerance covers the bf16 MXU operands used for the 3x3-conv / mix matmuls
    assert err < 5e-2, f"max abs err {err}"
    print("KERNEL_OK")
</pallas_src>

<mosaic_0001>
module attributes {stable_mosaic.version = 11 : i64} {
  func.func @probe(%arg0: memref<8x128xf32, #tpu.memory_space<vmem>>, %arg1: memref<8x128xf32, #tpu.memory_space<vmem>>) attributes {dimension_semantics = [], scalar_prefetch = 0 : i64, scratch_operands = 0 : i64, tpu.core_type = #tpu.core_type<tc>} {
    %c0 = arith.constant 0 : index
    %c0_0 = arith.constant 0 : index
    %0 = vector.load %arg0[%c0, %c0_0] : memref<8x128xf32, #tpu.memory_space<vmem>>, vector<8x128xf32>
    %c1_i32 = arith.constant 1 : i32
    %1 = tpu.dynamic_rotate %0 by %c1_i32 dim 1 : vector<8x128xf32>, i32 -> vector<8x128xf32>
    %c0_1 = arith.constant 0 : index
    %c0_2 = arith.constant 0 : index
    %2 = vector.load %arg1[%c0_1, %c0_2] : memref<8x128xf32, #tpu.memory_space<vmem>>, vector<8x128xf32>
    tpu.vector_store %arg1[%c0_1, %c0_2], %1 {strides = array<i32>} : memref<8x128xf32, #tpu.memory_space<vmem>>, vector<8x128xf32>,
    return
  }
}

module attributes {stable_mosaic.version = 11 : i64} {
  func.func @ema_kernel(%arg0: i32, %arg1: memref<16x256xf32, #tpu.memory_space<vmem>>, %arg2: memref<16x16xf32, #tpu.memory_space<vmem>>, %arg3: memref<16x144xbf16, #tpu.memory_space<vmem>>, %arg4: memref<16x4xf32, #tpu.memory_space<vmem>>, %arg5: memref<64x256xf32, #tpu.memory_space<vmem>>, %arg6: memref<9x256xf32, #tpu.memory_space<vmem>>, %arg7: memref<16x16xbf16, #tpu.memory_space<vmem>>, %arg8: memref<16x256xf32, #tpu.memory_space<vmem>>, %arg9: memref<144x256xbf16, #tpu.memory_space<vmem>>) attributes {dimension_semantics = [#tpu.dimension_semantics<parallel>], iteration_bounds = array<i64: 2>, scalar_prefetch = 0 : i64, scratch_operands = 1 : i64, tpu.core_type = #tpu.core_type<tc>, window_params = [{transform_indices = @transform_0, window_bounds = array<i64: 16, 256>}, {pipeline_mode = #tpu.pipeline_mode<synchronous>, transform_indices = @transform_1, window_bounds = array<i64: 16, 16>}, {pipeline_mode = #tpu.pipeline_mode<synchronous>, transform_indices = @transform_2, window_bounds = array<i64: 16, 144>}, {pipeline_mode = #tpu.pipeline_mode<synchronous>, transform_indices = @transform_3, window_bounds = array<i64: 16, 4>}, {pipeline_mode = #tpu.pipeline_mode<synchronous>, transform_indices = @transform_4, window_bounds = array<i64: 64, 256>}, {pipeline_mode = #tpu.pipeline_mode<synchronous>, transform_indices = @transform_5, window_bounds = array<i64: 9, 256>}, {pipeline_mode = #tpu.pipeline_mode<synchronous>, transform_indices = @transform_6, window_bounds = array<i64: 16, 16>}, {transform_indices = @transform_7, window_bounds = array<i64: 16, 256>}]} {
    %c0 = arith.constant 0 : index
    %c0_0 = arith.constant 0 : index
    %0 = vector.load %arg1[%c0, %c0_0] : memref<16x256xf32, #tpu.memory_space<vmem>>, vector<16x256xf32>
    %c0_1 = arith.constant 0 : index
    %c0_2 = arith.constant 0 : index
    %1 = vector.load %arg4[%c0_1, %c0_2] : memref<16x4xf32, #tpu.memory_space<vmem>>, vector<16x1xf32>
    %c0_3 = arith.constant 0 : index
    %c1 = arith.constant 1 : index
    %2 = vector.load %arg4[%c0_3, %c1] : memref<16x4xf32, #tpu.memory_space<vmem>>, vector<16x1xf32>
    %c0_4 = arith.constant 0 : index
    %c2 = arith.constant 2 : index
    %3 = vector.load %arg4[%c0_4, %c2] : memref<16x4xf32, #tpu.memory_space<vmem>>, vector<16x1xf32>
    %c0_5 = arith.constant 0 : index
    %c3 = arith.constant 3 : index
    %4 = vector.load %arg4[%c0_5, %c3] : memref<16x4xf32, #tpu.memory_space<vmem>>, vector<16x1xf32>
    %c0_6 = arith.constant 0 : index
    %c0_7 = arith.constant 0 : index
    %5 = vector.load %arg5[%c0_6, %c0_7] : memref<64x256xf32, #tpu.memory_space<vmem>>, vector<64x256xf32>
    %6 = vector.extract_strided_slice %5 {offsets = [0, 0], sizes = [32, 256], strides = [1, 1]} : vector<64x256xf32> to vector<32x256xf32>
    %7 = vector.extract_strided_slice %5 {offsets = [32, 0], sizes = [16, 256], strides = [1, 1]} : vector<64x256xf32> to vector<16x256xf32>
    %8 = vector.extract_strided_slice %5 {offsets = [48, 0], sizes = [16, 256], strides = [1, 1]} : vector<64x256xf32> to vector<16x256xf32>
    %cst = arith.constant dense<0.000000e+00> : vector<16x32xf32>
    %9 = tpu.matmul %0, %6, %cst {dimension_numbers = #tpu.dot_dimension_numbers<[1], [1], [0], [0], [0, 0, 1, 0], [], []>} : vector<16x256xf32>, vector<32x256xf32>, vector<16x32xf32> -> vector<16x32xf32>
    %c0_8 = arith.constant 0 : index
    %c0_9 = arith.constant 0 : index
    %10 = vector.load %arg2[%c0_8, %c0_9] : memref<16x16xf32, #tpu.memory_space<vmem>>, vector<16x16xf32>
    %cst_10 = arith.constant dense<0.000000e+00> : vector<16x32xf32>
    %11 = tpu.matmul %10, %9, %cst_10 {dimension_numbers = #tpu.dot_dimension_numbers<[1], [0], [0], [1], [0, 0, 1, 1], [], []>} : vector<16x16xf32>, vector<16x32xf32>, vector<16x32xf32> -> vector<16x32xf32>
    %12 = vector.broadcast %1 : vector<16x1xf32> to vector<16x32xf32>
    %13 = arith.addf %11, %12 : vector<16x32xf32>
    %14 = arith.negf %13 : vector<16x32xf32>
    %15 = math.exp %14 : vector<16x32xf32>
    %cst_11 = arith.constant 1.000000e+00 : f32
    %16 = vector.broadcast %cst_11 : f32 to vector<16x32xf32>
    %17 = arith.addf %16, %15 : vector<16x32xf32>
    %18 = arith.divf %16, %17 : vector<16x32xf32>
    %19 = vector.extract_strided_slice %18 {offsets = [0, 0], sizes = [16, 16], strides = [1, 1]} : vector<16x32xf32> to vector<16x16xf32>
    %cst_12 = arith.constant dense<0.000000e+00> : vector<16x256xf32>
    %20 = tpu.matmul %19, %7, %cst_12 {dimension_numbers = #tpu.dot_dimension_numbers<[1], [0], [0], [1], [0, 0, 1, 1], [], []>} : vector<16x16xf32>, vector<16x256xf32>, vector<16x256xf32> -> vector<16x256xf32>
    %21 = vector.extract_strided_slice %18 {offsets = [0, 16], sizes = [16, 16], strides = [1, 1]} : vector<16x32xf32> to vector<16x16xf32>
    %cst_13 = arith.constant dense<0.000000e+00> : vector<16x256xf32>
    %22 = tpu.matmul %21, %8, %cst_13 {dimension_numbers = #tpu.dot_dimension_numbers<[1], [0], [0], [1], [0, 0, 1, 1], [], []>} : vector<16x16xf32>, vector<16x256xf32>, vector<16x256xf32> -> vector<16x256xf32>
    %23 = arith.mulf %20, %22 : vector<16x256xf32>
    %24 = arith.mulf %0, %23 : vector<16x256xf32>
    %cst_14 = arith.constant dense<0.000000e+00> : vector<16xf32>
    %25 = vector.multi_reduction <add>, %24, %cst_14 [1] : vector<16x256xf32> to vector<16xf32>
    %26 = vector.shape_cast %25 : vector<16xf32> to vector<16x1xf32>
    %cst_15 = arith.constant 2.560000e+02 : f32
    %27 = vector.broadcast %cst_15 : f32 to vector<16x1xf32>
    %28 = arith.divf %26, %27 : vector<16x1xf32>
    %29 = vector.broadcast %28 : vector<16x1xf32> to vector<16x256xf32>
    %30 = arith.subf %24, %29 : vector<16x256xf32>
    %31 = arith.mulf %30, %30 : vector<16x256xf32>
    %cst_16 = arith.constant dense<0.000000e+00> : vector<16xf32>
    %32 = vector.multi_reduction <add>, %31, %cst_16 [1] : vector<16x256xf32> to vector<16xf32>
    %33 = vector.shape_cast %32 : vector<16xf32> to vector<16x1xf32>
    %cst_17 = arith.constant 2.560000e+02 : f32
    %34 = vector.broadcast %cst_17 : f32 to vector<16x1xf32>
    %35 = arith.divf %33, %34 : vector<16x1xf32>
    %36 = vector.broadcast %28 : vector<16x1xf32> to vector<16x256xf32>
    %37 = arith.subf %24, %36 : vector<16x256xf32>
    %cst_18 = arith.constant 9.99999974E-6 : f32
    %38 = vector.broadcast %cst_18 : f32 to vector<16x1xf32>
    %39 = arith.addf %35, %38 : vector<16x1xf32>
    %40 = math.rsqrt %39 : vector<16x1xf32>
    %41 = vector.broadcast %40 : vector<16x1xf32> to vector<16x256xf32>
    %42 = arith.mulf %37, %41 : vector<16x256xf32>
    %43 = vector.broadcast %3 : vector<16x1xf32> to vector<16x256xf32>
    %44 = arith.mulf %42, %43 : vector<16x256xf32>
    %45 = vector.broadcast %4 : vector<16x1xf32> to vector<16x256xf32>
    %46 = arith.addf %44, %45 : vector<16x256xf32>
    %c0_19 = arith.constant 0 : index
    %c0_20 = arith.constant 0 : index
    %47 = vector.load %arg6[%c0_19, %c0_20] : memref<9x256xf32, #tpu.memory_space<vmem>>, vector<9x256xf32>
    %48 = vector.extract_strided_slice %0 {offsets = [0, 239], sizes = [16, 17], strides = [1, 1]} : vector<16x256xf32> to vector<16x17xf32>
    %49 = vector.extract_strided_slice %0 {offsets = [0, 0], sizes = [16, 239], strides = [1, 1]} : vector<16x256xf32> to vector<16x239xf32>
    %50 = tpu.concatenate %48, %49 in 1 : vector<16x17xf32>, vector<16x239xf32> -> vector<16x256xf32>
    %51 = vector.extract_strided_slice %47 {offsets = [0, 0], sizes = [1, 256], strides = [1, 1]} : vector<9x256xf32> to vector<1x256xf32>
    %52 = vector.broadcast %51 : vector<1x256xf32> to vector<16x256xf32>
    %53 = arith.mulf %50, %52 : vector<16x256xf32>
    %54 = arith.truncf %53 : vector<16x256xf32> to vector<16x256xbf16>
    %c0_21 = arith.constant 0 : index
    %c0_22 = arith.constant 0 : index
    %55 = vector.load %arg9[%c0_21, %c0_22] : memref<144x256xbf16, #tpu.memory_space<vmem>>, vector<16x256xbf16>
    tpu.vector_store %arg9[%c0_21, %c0_22], %54 {strides = array<i32>} : memref<144x256xbf16, #tpu.memory_space<vmem>>, vector<16x256xbf16>,
    %56 = vector.extract_strided_slice %0 {offsets = [0, 240], sizes = [16, 16], strides = [1, 1]} : vector<16x256xf32> to vector<16x16xf32>
    %57 = vector.extract_strided_slice %0 {offsets = [0, 0], sizes = [16, 240], strides = [1, 1]} : vector<16x256xf32> to vector<16x240xf32>
    %58 = tpu.concatenate %56, %57 in 1 : vector<16x16xf32>, vector<16x240xf32> -> vector<16x256xf32>
    %59 = vector.extract_strided_slice %47 {offsets = [1, 0], sizes = [1, 256], strides = [1, 1]} : vector<9x256xf32> to vector<1x256xf32>
    %60 = vector.broadcast %59 : vector<1x256xf32> to vector<16x256xf32>
    %61 = arith.mulf %58, %60 : vector<16x256xf32>
    %62 = arith.truncf %61 : vector<16x256xf32> to vector<16x256xbf16>
    %c16 = arith.constant 16 : index
    %c0_23 = arith.constant 0 : index
    %63 = vector.load %arg9[%c16, %c0_23] : memref<144x256xbf16, #tpu.memory_space<vmem>>, vector<16x256xbf16>
    tpu.vector_store %arg9[%c16, %c0_23], %62 {strides = array<i32>} : memref<144x256xbf16, #tpu.memory_space<vmem>>, vector<16x256xbf16>,
    %64 = vector.extract_strided_slice %0 {offsets = [0, 241], sizes = [16, 15], strides = [1, 1]} : vector<16x256xf32> to vector<16x15xf32>
    %65 = vector.extract_strided_slice %0 {offsets = [0, 0], sizes = [16, 241], strides = [1, 1]} : vector<16x256xf32> to vector<16x241xf32>
    %66 = tpu.concatenate %64, %65 in 1 : vector<16x15xf32>, vector<16x241xf32> -> vector<16x256xf32>
    %67 = vector.extract_strided_slice %47 {offsets = [2, 0], sizes = [1, 256], strides = [1, 1]} : vector<9x256xf32> to vector<1x256xf32>
    %68 = vector.broadcast %67 : vector<1x256xf32> to vector<16x256xf32>
    %69 = arith.mulf %66, %68 : vector<16x256xf32>
    %70 = arith.truncf %69 : vector<16x256xf32> to vector<16x256xbf16>
    %c32 = arith.constant 32 : index
    %c0_24 = arith.constant 0 : index
    %71 = vector.load %arg9[%c32, %c0_24] : memref<144x256xbf16, #tpu.memory_space<vmem>>, vector<16x256xbf16>
    tpu.vector_store %arg9[%c32, %c0_24], %70 {strides = array<i32>} : memref<144x256xbf16, #tpu.memory_space<vmem>>, vector<16x256xbf16>,
    %72 = vector.extract_strided_slice %0 {offsets = [0, 255], sizes = [16, 1], strides = [1, 1]} : vector<16x256xf32> to vector<16x1xf32>
    %73 = vector.extract_strided_slice %0 {offsets = [0, 0], sizes = [16, 255], strides = [1, 1]} : vector<16x256xf32> to vector<16x255xf32>
    %74 = tpu.concatenate %72, %73 in 1 : vector<16x1xf32>, vector<16x255xf32> -> vector<16x256xf32>
    %75 = vector.extract_strided_slice %47 {offsets = [3, 0], sizes = [1, 256], strides = [1, 1]} : vector<9x256xf32> to vector<1x256xf32>
    %76 = vector.broadcast %75 : vector<1x256xf32> to vector<16x256xf32>
    %77 = arith.mulf %74, %76 : vector<16x256xf32>
    %78 = arith.truncf %77 : vector<16x256xf32> to vector<16x256xbf16>
    %c48 = arith.constant 48 : index
    %c0_25 = arith.constant 0 : index
    %79 = vector.load %arg9[%c48, %c0_25] : memref<144x256xbf16, #tpu.memory_space<vmem>>, vector<16x256xbf16>
    tpu.vector_store %arg9[%c48, %c0_25], %78 {strides = array<i32>} : memref<144x256xbf16, #tpu.memory_space<vmem>>, vector<16x256xbf16>,
    %80 = vector.extract_strided_slice %47 {offsets = [4, 0], sizes = [1, 256], strides = [1, 1]} : vector<9x256xf32> to vector<1x256xf32>
    %81 = vector.broadcast %80 : vector<1x256xf32> to vector<16x256xf32>
    %82 = arith.mulf %0, %81 : vector<16x256xf32>
    %83 = arith.truncf %82 : vector<16x256xf32> to vector<16x256xbf16>
    %c64 = arith.constant 64 : index
    %c0_26 = arith.constant 0 : index
    %84 = vector.load %arg9[%c64, %c0_26] : memref<144x256xbf16, #tpu.memory_space<vmem>>, vector<16x256xbf16>
    tpu.vector_store %arg9[%c64, %c0_26], %83 {strides = array<i32>} : memref<144x256xbf16, #tpu.memory_space<vmem>>, vector<16x256xbf16>,
    %85 = vector.extract_strided_slice %0 {offsets = [0, 1], sizes = [16, 255], strides = [1, 1]} : vector<16x256xf32> to vector<16x255xf32>
    %86 = vector.extract_strided_slice %0 {offsets = [0, 0], sizes = [16, 1], strides = [1, 1]} : vector<16x256xf32> to vector<16x1xf32>
    %87 = tpu.concatenate %85, %86 in 1 : vector<16x255xf32>, vector<16x1xf32> -> vector<16x256xf32>
    %88 = vector.extract_strided_slice %47 {offsets = [5, 0], sizes = [1, 256], strides = [1, 1]} : vector<9x256xf32> to vector<1x256xf32>
    %89 = vector.broadcast %88 : vector<1x256xf32> to vector<16x256xf32>
    %90 = arith.mulf %87, %89 : vector<16x256xf32>
    %91 = arith.truncf %90 : vector<16x256xf32> to vector<16x256xbf16>
    %c80 = arith.constant 80 : index
    %c0_27 = arith.constant 0 : index
    %92 = vector.load %arg9[%c80, %c0_27] : memref<144x256xbf16, #tpu.memory_space<vmem>>, vector<16x256xbf16>
    tpu.vector_store %arg9[%c80, %c0_27], %91 {strides = array<i32>} : memref<144x256xbf16, #tpu.memory_space<vmem>>, vector<16x256xbf16>,
    %93 = vector.extract_strided_slice %0 {offsets = [0, 15], sizes = [16, 241], strides = [1, 1]} : vector<16x256xf32> to vector<16x241xf32>
    %94 = vector.extract_strided_slice %0 {offsets = [0, 0], sizes = [16, 15], strides = [1, 1]} : vector<16x256xf32> to vector<16x15xf32>
    %95 = tpu.concatenate %93, %94 in 1 : vector<16x241xf32>, vector<16x15xf32> -> vector<16x256xf32>
    %96 = vector.extract_strided_slice %47 {offsets = [6, 0], sizes = [1, 256], strides = [1, 1]} : vector<9x256xf32> to vector<1x256xf32>
    %97 = vector.broadcast %96 : vector<1x256xf32> to vector<16x256xf32>
    %98 = arith.mulf %95, %97 : vector<16x256xf32>
    %99 = arith.truncf %98 : vector<16x256xf32> to vector<16x256xbf16>
    %c96 = arith.constant 96 : index
    %c0_28 = arith.constant 0 : index
    %100 = vector.load %arg9[%c96, %c0_28] : memref<144x256xbf16, #tpu.memory_space<vmem>>, vector<16x256xbf16>
    tpu.vector_store %arg9[%c96, %c0_28], %99 {strides = array<i32>} : memref<144x256xbf16, #tpu.memory_space<vmem>>, vector<16x256xbf16>,
    %101 = vector.extract_strided_slice %0 {offsets = [0, 16], sizes = [16, 240], strides = [1, 1]} : vector<16x256xf32> to vector<16x240xf32>
    %102 = vector.extract_strided_slice %0 {offsets = [0, 0], sizes = [16, 16], strides = [1, 1]} : vector<16x256xf32> to vector<16x16xf32>
    %103 = tpu.concatenate %101, %102 in 1 : vector<16x240xf32>, vector<16x16xf32> -> vector<16x256xf32>
    %104 = vector.extract_strided_slice %47 {offsets = [7, 0], sizes = [1, 256], strides = [1, 1]} : vector<9x256xf32> to vector<1x256xf32>
    %105 = vector.broadcast %104 : vector<1x256xf32> to vector<16x256xf32>
    %106 = arith.mulf %103, %105 : vector<16x256xf32>
    %107 = arith.truncf %106 : vector<16x256xf32> to vector<16x256xbf16>
    %c112 = arith.constant 112 : index
    %c0_29 = arith.constant 0 : index
    %108 = vector.load %arg9[%c112, %c0_29] : memref<144x256xbf16, #tpu.memory_space<vmem>>, vector<16x256xbf16>
    tpu.vector_store %arg9[%c112, %c0_29], %107 {strides = array<i32>} : memref<144x256xbf16, #tpu.memory_space<vmem>>, vector<16x256xbf16>,
    %109 = vector.extract_strided_slice %0 {offsets = [0, 17], sizes = [16, 239], strides = [1, 1]} : vector<16x256xf32> to vector<16x239xf32>
    %110 = vector.extract_strided_slice %0 {offsets = [0, 0], sizes = [16, 17], strides = [1, 1]} : vector<16x256xf32> to vector<16x17xf32>
    %111 = tpu.concatenate %109, %110 in 1 : vector<16x239xf32>, vector<16x17xf32> -> vector<16x256xf32>
    %112 = vector.extract_strided_slice %47 {offsets = [8, 0], sizes = [1, 256], strides = [1, 1]} : vector<9x256xf32> to vector<1x256xf32>
    %113 = vector.broadcast %112 : vector<1x256xf32> to vector<16x256xf32>
    %114 = arith.mulf %111, %113 : vector<16x256xf32>
    %115 = arith.truncf %114 : vector<16x256xf32> to vector<16x256xbf16>
    %c128 = arith.constant 128 : index
    %c0_30 = arith.constant 0 : index
    %116 = vector.load %arg9[%c128, %c0_30] : memref<144x256xbf16, #tpu.memory_space<vmem>>, vector<16x256xbf16>
    tpu.vector_store %arg9[%c128, %c0_30], %115 {strides = array<i32>} : memref<144x256xbf16, #tpu.memory_space<vmem>>, vector<16x256xbf16>,
    %c0_31 = arith.constant 0 : index
    %c0_32 = arith.constant 0 : index
    %117 = vector.load %arg3[%c0_31, %c0_32] : memref<16x144xbf16, #tpu.memory_space<vmem>>, vector<16x144xbf16>
    %c0_33 = arith.constant 0 : index
    %c0_34 = arith.constant 0 : index
    %118 = vector.load %arg9[%c0_33, %c0_34] : memref<144x256xbf16, #tpu.memory_space<vmem>>, vector<144x256xbf16>
    %cst_35 = arith.constant dense<0.000000e+00> : vector<16x256xf32>
    %119 = tpu.matmul %117, %118, %cst_35 {dimension_numbers = #tpu.dot_dimension_numbers<[1], [0], [0], [1], [0, 0, 1, 1], [], []>} : vector<16x144xbf16>, vector<144x256xbf16>, vector<16x256xf32> -> vector<16x256xf32>
    %120 = vector.broadcast %2 : vector<16x1xf32> to vector<16x256xf32>
    %121 = arith.addf %119, %120 : vector<16x256xf32>
    %c0_36 = arith.constant 0 : index
    %c0_37 = arith.constant 0 : index
    %122 = vector.load %arg7[%c0_36, %c0_37] : memref<16x16xbf16, #tpu.memory_space<vmem>>, vector<16x16xbf16>
    %cst_38 = arith.constant dense<0.000000e+00> : vector<16xf32>
    %123 = vector.multi_reduction <add>, %46, %cst_38 [1] : vector<16x256xf32> to vector<16xf32>
    %124 = vector.shape_cast %123 : vector<16xf32> to vector<16x1xf32>
    %cst_39 = arith.constant 2.560000e+02 : f32
    %125 = vector.broadcast %cst_39 : f32 to vector<16x1xf32>
    %126 = arith.divf %124, %125 : vector<16x1xf32>
    %cst_40 = arith.constant dense<0.000000e+00> : vector<16xf32>
    %127 = vector.multi_reduction <add>, %121, %cst_40 [1] : vector<16x256xf32> to vector<16xf32>
    %128 = vector.shape_cast %127 : vector<16xf32> to vector<16x1xf32>
    %cst_41 = arith.constant 2.560000e+02 : f32
    %129 = vector.broadcast %cst_41 : f32 to vector<16x1xf32>
    %130 = arith.divf %128, %129 : vector<16x1xf32>
    %131 = tpu.concatenate %126, %130 in 1 : vector<16x1xf32>, vector<16x1xf32> -> vector<16x2xf32>
    %cst_42 = arith.constant dense<0.000000e+00> : vector<16x2xf32>
    %132 = tpu.matmul %122, %131, %cst_42 {dimension_numbers = #tpu.dot_dimension_numbers<[1], [0], [0], [1], [0, 0, 1, 1], [], []>} : vector<16x16xbf16>, vector<16x2xf32>, vector<16x2xf32> -> vector<16x2xf32>
    %cst_43 = arith.constant 2.500000e-01 : f32
    %133 = vector.broadcast %cst_43 : f32 to vector<16x2xf32>
    %134 = arith.mulf %132, %133 : vector<16x2xf32>
    %135 = arith.subf %131, %134 : vector<16x2xf32>
    %136 = math.exp %135 : vector<16x2xf32>
    %cst_44 = arith.constant dense<0.000000e+00> : vector<16x2xf32>
    %137 = tpu.matmul %122, %136, %cst_44 {dimension_numbers = #tpu.dot_dimension_numbers<[1], [0], [0], [1], [0, 0, 1, 1], [], []>} : vector<16x16xbf16>, vector<16x2xf32>, vector<16x2xf32> -> vector<16x2xf32>
    %138 = vector.extract_strided_slice %136 {offsets = [0, 0], sizes = [16, 1], strides = [1, 1]} : vector<16x2xf32> to vector<16x1xf32>
    %139 = vector.extract_strided_slice %137 {offsets = [0, 0], sizes = [16, 1], strides = [1, 1]} : vector<16x2xf32> to vector<16x1xf32>
    %140 = arith.divf %138, %139 : vector<16x1xf32>
    %141 = vector.extract_strided_slice %136 {offsets = [0, 1], sizes = [16, 1], strides = [1, 1]} : vector<16x2xf32> to vector<16x1xf32>
    %142 = vector.extract_strided_slice %137 {offsets = [0, 1], sizes = [16, 1], strides = [1, 1]} : vector<16x2xf32> to vector<16x1xf32>
    %143 = arith.divf %141, %142 : vector<16x1xf32>
    %144 = vector.broadcast %140 : vector<16x1xf32> to vector<16x256xf32>
    %145 = arith.mulf %144, %121 : vector<16x256xf32>
    %146 = vector.broadcast %143 : vector<16x1xf32> to vector<16x256xf32>
    %147 = arith.mulf %146, %46 : vector<16x256xf32>
    %148 = arith.addf %145, %147 : vector<16x256xf32>
    %149 = arith.truncf %148 : vector<16x256xf32> to vector<16x256xbf16>
    %cst_45 = arith.constant dense<0.000000e+00> : vector<16x256xf32>
    %150 = tpu.matmul %122, %149, %cst_45 {dimension_numbers = #tpu.dot_dimension_numbers<[1], [0], [0], [1], [0, 0, 1, 1], [], []>} : vector<16x16xbf16>, vector<16x256xbf16>, vector<16x256xf32> -> vector<16x256xf32>
    %151 = arith.negf %150 : vector<16x256xf32>
    %152 = math.exp %151 : vector<16x256xf32>
    %cst_46 = arith.constant 1.000000e+00 : f32
    %153 = vector.broadcast %cst_46 : f32 to vector<16x256xf32>
    %154 = arith.addf %153, %152 : vector<16x256xf32>
    %155 = arith.divf %153, %154 : vector<16x256xf32>
    %156 = arith.mulf %0, %155 : vector<16x256xf32>
    %c0_47 = arith.constant 0 : index
    %c0_48 = arith.constant 0 : index
    %157 = vector.load %arg8[%c0_47, %c0_48] : memref<16x256xf32, #tpu.memory_space<vmem>>, vector<16x256xf32>
    tpu.vector_store %arg8[%c0_47, %c0_48], %156 {strides = array<i32>} : memref<16x256xf32, #tpu.memory_space<vmem>>, vector<16x256xf32>,
    return
  }
  func.func @transform_0(%arg0: i32) -> (i32, i32) {
    %c0_i32 = arith.constant 0 : i32
    %c0_i32_0 = arith.constant 0 : i32
    return %arg0, %c0_i32 : i32, i32
  }
  func.func @transform_1(%arg0: i32) -> (i32, i32) {
    %c0_i32 = arith.constant 0 : i32
    %c0_i32_0 = arith.constant 0 : i32
    %c0_i32_1 = arith.constant 0 : i32
    return %c0_i32, %c0_i32_0 : i32, i32
  }
  func.func @transform_2(%arg0: i32) -> (i32, i32) {
    %c0_i32 = arith.constant 0 : i32
    %c0_i32_0 = arith.constant 0 : i32
    %c0_i32_1 = arith.constant 0 : i32
    return %c0_i32, %c0_i32_0 : i32, i32
  }
  func.func @transform_3(%arg0: i32) -> (i32, i32) {
    %c0_i32 = arith.constant 0 : i32
    %c0_i32_0 = arith.constant 0 : i32
    %c0_i32_1 = arith.constant 0 : i32
    return %c0_i32, %c0_i32_0 : i32, i32
  }
  func.func @transform_4(%arg0: i32) -> (i32, i32) {
    %c0_i32 = arith.constant 0 : i32
    %c0_i32_0 = arith.constant 0 : i32
    %c0_i32_1 = arith.constant 0 : i32
    return %c0_i32, %c0_i32_0 : i32, i32
  }
  func.func @transform_5(%arg0: i32) -> (i32, i32) {
    %c0_i32 = arith.constant 0 : i32
    %c0_i32_0 = arith.constant 0 : i32
    %c0_i32_1 = arith.constant 0 : i32
    return %c0_i32, %c0_i32_0 : i32, i32
  }
  func.func @transform_6(%arg0: i32) -> (i32, i32) {
    %c0_i32 = arith.constant 0 : i32
    %c0_i32_0 = arith.constant 0 : i32
    %c0_i32_1 = arith.constant 0 : i32
    return %c0_i32, %c0_i32_0 : i32, i32
  }
  func.func @transform_7(%arg0: i32) -> (i32, i32) {
    %c0_i32 = arith.constant 0 : i32
    %c0_i32_0 = arith.constant 0 : i32
    return %arg0, %c0_i32 : i32, i32
  }
}

</mosaic_0001>

<llo_original>
// kernel: tpu_custom_call.1
$region0: #{tpu_custom_call.1}
  #allocation0 [shape = 'u32[]', space=smem, size = 0x4, offset = 0x4, fixed_abs, tag = 'smem constant byte address 0x4 - core index']
  #allocation1 [shape = 'u32[144,128]{1,0:T(1,128)}', space=vmem, size = 0x12000, scoped, tag = 'internal scratch']
  %s0 = inlined_call_operand.hbm [shape: f32[8,128], index: 0, kind: input, shape index: {}]
  %s1 = inlined_call_operand.hbm [shape: f32[8,128], index: 1, kind: output, shape index: {}]
  %s2 = sld [smem:[#allocation0]]
  $region18: #{tpu_custom_call.1} parent=0
    _
  %s4 = ssub.s32 1, %s2
  %s5 = scalar_select 0, %s4, %s2
  $region1: #{tpu_custom_call.1} parent=0
    #allocation2 [shape = 'u8[4096]{0}', space=vmem, size = 0x1000, scoped, tag = 'input window, operand 0, single buffered']
    #allocation3 [shape = 's32[1]{0}', space=sflag, size = 0x4, scoped, tag = 'scoped memory for tpu_custom_call.1']
    #allocation4 [shape = 's32[1]{0}', space=sflag, size = 0x4, scoped, tag = 'scoped memory for tpu_custom_call.1']
    #allocation5 [shape = 'u8[4096]{0}', space=vmem, size = 0x1000, scoped, tag = 'output window, operand 0, single buffered']
    %6 = vsyncpa [#allocation3], 0
    %7 = vsyncpa [#allocation4], 0
    // Predicated region
    $region2: #{tpu_custom_call.1} parent=1 // pred_check
      _
    $region3: #{tpu_custom_call.1} parent=1 // pred_check_branch
      %9 = sbr.rel (0) target = $region5
    $region4: #{tpu_custom_call.1} parent=1 // pred_region
      %s11 = ssub.s32 128, 128
      %12 = vsyncadd [#allocation3], %s11
      %s14 = sshll.u32 [#allocation2], 4
      %s15 = int_to_ptr.vmem [resolvable:$true] %s14
      %17 = dma.hbm_to_vmem [thread:$0]  %s0, 128, %s15, [#allocation3]
    $region5: #{tpu_custom_call.1} parent=1 // pred_fallthru
      _
    // Predicated region
    $region6: #{tpu_custom_call.1} parent=1 // pred_check
      _
    $region7: #{tpu_custom_call.1} parent=1 // pred_check_branch
      %19 = sbr.rel (0) target = $region9
    $region8: #{tpu_custom_call.1} parent=1 // pred_region
      %20 = dma.done [#allocation3], 128
    $region9: #{tpu_custom_call.1} parent=1 // pred_fallthru
      _
    %v21 = vld [vmem:[#allocation2] sm:$0xff]
    %22 = vrot.lane.b32.xlu0 %v21, 1
    %v23 = vpop.permute.xlu0 %22
    %24 = vst [vmem:[#allocation5] sm:$0xff] %v23
    // Predicated region
    $region10: #{tpu_custom_call.1} parent=1 // pred_check
      _
    $region11: #{tpu_custom_call.1} parent=1 // pred_check_branch
      %26 = sbr.rel (0) target = $region13
    $region12: #{tpu_custom_call.1} parent=1 // pred_region
      %s28 = ssub.s32 128, 128
      %29 = vsyncadd [#allocation4], %s28
      %s31 = sshll.u32 [#allocation5], 4
      %s32 = int_to_ptr.vmem [resolvable:$true] %s31
      %34 = dma.vmem_to_hbm [thread:$0]  %s32, 128, %s1, [#allocation4]
    $region13: #{tpu_custom_call.1} parent=1 // pred_fallthru
      _
    // Predicated region
    $region14: #{tpu_custom_call.1} parent=1 // pred_check
      _
    $region15: #{tpu_custom_call.1} parent=1 // pred_check_branch
      %36 = sbr.rel (0) target = $region17
    $region16: #{tpu_custom_call.1} parent=1 // pred_region
      %37 = dma.done [#allocation4], 128
    $region17: #{tpu_custom_call.1} parent=1 // pred_fallthru
      _
    %38 = vsyncpa [#allocation3], 1
    %39 = vsyncpa [#allocation4], 1

// kernel: _ema_jit.1
$region0: #{_ema_jit.1}
  #allocation0 [shape = 'u32[]', space=smem, size = 0x4, offset = 0x4, fixed_abs, tag = 'smem constant byte address 0x4 - core index']
  #allocation1 [shape = 'u32[144,128]{1,0:T(1,128)}', space=vmem, size = 0x12000, scoped, tag = 'internal scratch']
  #allocation2 [shape = 'bf16[144,256]{1,0:T(16,128)(2,1)}', space=vmem, size = 0x12000, scoped, tag = 'scratch operand']
  %s0 = inlined_call_operand.vmem [shape: f32[32,256], index: 0, kind: input, shape index: {}]
  %s1 = inlined_call_operand.vmem [shape: f32[16,16], index: 1, kind: input, shape index: {}]
  %s2 = inlined_call_operand.vmem [shape: bf16[16,144], index: 2, kind: input, shape index: {}]
  %s3 = inlined_call_operand.vmem [shape: f32[16,4], index: 3, kind: input, shape index: {}]
  %s4 = inlined_call_operand.vmem [shape: f32[64,256], index: 4, kind: input, shape index: {}]
  %s5 = inlined_call_operand.vmem [shape: f32[9,256], index: 5, kind: input, shape index: {}]
  %s6 = inlined_call_operand.vmem [shape: bf16[16,16], index: 6, kind: input, shape index: {}]
  %s7 = inlined_call_operand.vmem [shape: f32[32,256], index: 7, kind: output, shape index: {}]
  %s8 = sld [smem:[#allocation0]]
  $region61: #{_ema_jit.1} parent=0
    _
  %s10 = ssub.s32 1, %s8
  %s11 = scalar_select 0, %s10, %s8
  loop: start=0, step=1, limit=4
  $region2: #{_ema_jit.1} parent=0 // loop_pre_header
    _
  $region3: #{_ema_jit.1} parent=0 // loop_header
    %s13 = sphi 0, %s17
    %p14 = scmp.ge.s32.totalorder %s13, 4
    %s23 = sphi 0, %s25
    %s26 = sphi 0, %s23
    %s27 = sphi 0, %s26
    %s43 = sphi 0, %s27
    %s47 = sphi 0, %s47
    %s49 = sphi 0, %s47
    %s50 = sphi 0, %s49
    %s64 = sphi 0, %s50
    %s68 = sphi 0, %s68
    %s70 = sphi 0, %s68
    %s71 = sphi 0, %s70
    %s85 = sphi 0, %s71
    %s89 = sphi 0, %s89
    %s91 = sphi 0, %s89
    %s92 = sphi 0, %s91
    %s106 = sphi 0, %s92
    %s110 = sphi 0, %s110
    %s112 = sphi 0, %s110
    %s113 = sphi 0, %s112
    %s127 = sphi 0, %s113
    %s131 = sphi 0, %s131
    %s133 = sphi 0, %s131
    %s134 = sphi 0, %s133
    %s148 = sphi 0, %s134
    %s152 = sphi 0, %s152
    %s154 = sphi 0, %s152
    %s155 = sphi 0, %s154
    %s169 = sphi 0, %s155
    %s175 = sphi 0, %s177
    %s178 = sphi 0, %s175
    %s179 = sphi 0, %s178
    %s195 = sphi 0, %s179
  $region4: #{_ema_jit.1} parent=0 // loop_header_branch
    %16 = sbr.rel (%p14) target = $region8
  $region5: #{_ema_jit.1} parent=0 // loop_body
    %s18 = ssub.s32 %s13, 1
    %s19 = ssub.s32 %s13, 2
    %s20 = sadd.s32 %s13, 1
    %s21 = ssub.s32 %s13, %s20
    %p22 = scmp.eq.s32.totalorder %s21, 0
    %s24 = sadd.s32 %s23, 1
    %s25 = scalar_select %p22, %s23, %s24
    %p28 = pneg %p22
    %p29 = scmp.eq.s32.totalorder %s13, 1
    %p30 = por %p28, %p29
    %p31 = scmp.ne.s32.totalorder %s23, %s26
    %p32 = scmp.eq.s32.totalorder %s13, 0
    %p33 = por %p31, %p32
    %p34 = scmp.ne.s32.totalorder %s23, %s26
    %p35 = scmp.eq.s32.totalorder %s18, 1
    %p36 = por %p34, %p35
    %p37 = scmp.ne.s32.totalorder %s26, %s27
    %p38 = scmp.eq.s32.totalorder %s18, 0
    %p39 = por %p37, %p38
    %p40 = scmp.ne.s32.totalorder %s26, %s27
    %p41 = scmp.eq.s32.totalorder %s19, 1
    %p42 = por %p40, %p41
    %p44 = scmp.ne.s32.totalorder %s27, %s43
    %p45 = scmp.eq.s32.totalorder %s19, 0
    %p46 = por %p44, %p45
    %s48 = sadd.s32 %s47, 1
    %p51 = scmp.eq.s32.totalorder %s13, 1
    %p52 = scmp.ne.s32.totalorder %s47, %s49
    %p53 = scmp.eq.s32.totalorder %s13, 0
    %p54 = por %p52, %p53
    %p55 = scmp.ne.s32.totalorder %s47, %s49
    %p56 = scmp.eq.s32.totalorder %s18, 1
    %p57 = por %p55, %p56
    %p58 = scmp.ne.s32.totalorder %s49, %s50
    %p59 = scmp.eq.s32.totalorder %s18, 0
    %p60 = por %p58, %p59
    %p61 = scmp.ne.s32.totalorder %s49, %s50
    %p62 = scmp.eq.s32.totalorder %s19, 1
    %p63 = por %p61, %p62
    %p65 = scmp.ne.s32.totalorder %s50, %s64
    %p66 = scmp.eq.s32.totalorder %s19, 0
    %p67 = por %p65, %p66
    %s69 = sadd.s32 %s68, 1
    %p72 = scmp.eq.s32.totalorder %s13, 1
    %p73 = scmp.ne.s32.totalorder %s68, %s70
    %p74 = scmp.eq.s32.totalorder %s13, 0
    %p75 = por %p73, %p74
    %p76 = scmp.ne.s32.totalorder %s68, %s70
    %p77 = scmp.eq.s32.totalorder %s18, 1
    %p78 = por %p76, %p77
    %p79 = scmp.ne.s32.totalorder %s70, %s71
    %p80 = scmp.eq.s32.totalorder %s18, 0
    %p81 = por %p79, %p80
    %p82 = scmp.ne.s32.totalorder %s70, %s71
    %p83 = scmp.eq.s32.totalorder %s19, 1
    %p84 = por %p82, %p83
    %p86 = scmp.ne.s32.totalorder %s71, %s85
    %p87 = scmp.eq.s32.totalorder %s19, 0
    %p88 = por %p86, %p87
    %s90 = sadd.s32 %s89, 1
    %p93 = scmp.eq.s32.totalorder %s13, 1
    %p94 = scmp.ne.s32.totalorder %s89, %s91
    %p95 = scmp.eq.s32.totalorder %s13, 0
    %p96 = por %p94, %p95
    %p97 = scmp.ne.s32.totalorder %s89, %s91
    %p98 = scmp.eq.s32.totalorder %s18, 1
    %p99 = por %p97, %p98
    %p100 = scmp.ne.s32.totalorder %s91, %s92
    %p101 = scmp.eq.s32.totalorder %s18, 0
    %p102 = por %p100, %p101
    %p103 = scmp.ne.s32.totalorder %s91, %s92
    %p104 = scmp.eq.s32.totalorder %s19, 1
    %p105 = por %p103, %p104
    %p107 = scmp.ne.s32.totalorder %s92, %s106
    %p108 = scmp.eq.s32.totalorder %s19, 0
    %p109 = por %p107, %p108
    %s111 = sadd.s32 %s110, 1
    %p114 = scmp.eq.s32.totalorder %s13, 1
    %p115 = scmp.ne.s32.totalorder %s110, %s112
    %p116 = scmp.eq.s32.totalorder %s13, 0
    %p117 = por %p115, %p116
    %p118 = scmp.ne.s32.totalorder %s110, %s112
    %p119 = scmp.eq.s32.totalorder %s18, 1
    %p120 = por %p118, %p119
    %p121 = scmp.ne.s32.totalorder %s112, %s113
    %p122 = scmp.eq.s32.totalorder %s18, 0
    %p123 = por %p121, %p122
    %p124 = scmp.ne.s32.totalorder %s112, %s113
    %p125 = scmp.eq.s32.totalorder %s19, 1
    %p126 = por %p124, %p125
    %p128 = scmp.ne.s32.totalorder %s113, %s127
    %p129 = scmp.eq.s32.totalorder %s19, 0
    %p130 = por %p128, %p129
    %s132 = sadd.s32 %s131, 1
    %p135 = scmp.eq.s32.totalorder %s13, 1
    %p136 = scmp.ne.s32.totalorder %s131, %s133
    %p137 = scmp.eq.s32.totalorder %s13, 0
    %p138 = por %p136, %p137
    %p139 = scmp.ne.s32.totalorder %s131, %s133
    %p140 = scmp.eq.s32.totalorder %s18, 1
    %p141 = por %p139, %p140
    %p142 = scmp.ne.s32.totalorder %s133, %s134
    %p143 = scmp.eq.s32.totalorder %s18, 0
    %p144 = por %p142, %p143
    %p145 = scmp.ne.s32.totalorder %s133, %s134
    %p146 = scmp.eq.s32.totalorder %s19, 1
    %p147 = por %p145, %p146
    %p149 = scmp.ne.s32.totalorder %s134, %s148
    %p150 = scmp.eq.s32.totalorder %s19, 0
    %p151 = por %p149, %p150
    %s153 = sadd.s32 %s152, 1
    %p156 = scmp.eq.s32.totalorder %s13, 1
    %p157 = scmp.ne.s32.totalorder %s152, %s154
    %p158 = scmp.eq.s32.totalorder %s13, 0
    %p159 = por %p157, %p158
    %p160 = scmp.ne.s32.totalorder %s152, %s154
    %p161 = scmp.eq.s32.totalorder %s18, 1
    %p162 = por %p160, %p161
    %p163 = scmp.ne.s32.totalorder %s154, %s155
    %p164 = scmp.eq.s32.totalorder %s18, 0
    %p165 = por %p163, %p164
    %p166 = scmp.ne.s32.totalorder %s154, %s155
    %p167 = scmp.eq.s32.totalorder %s19, 1
    %p168 = por %p166, %p167
    %p170 = scmp.ne.s32.totalorder %s155, %s169
    %p171 = scmp.eq.s32.totalorder %s19, 0
    %p172 = por %p170, %p171
    %s173 = ssub.s32 %s13, %s20
    %p174 = scmp.eq.s32.totalorder %s173, 0
    %s176 = sadd.s32 %s175, 1
    %s177 = scalar_select %p174, %s175, %s176
    %p180 = pneg %p174
    %p181 = scmp.eq.s32.totalorder %s13, 1
    %p182 = por %p180, %p181
    %p183 = scmp.ne.s32.totalorder %s175, %s178
    %p184 = scmp.eq.s32.totalorder %s13, 0
    %p185 = por %p183, %p184
    %p186 = scmp.ne.s32.totalorder %s175, %s178
    %p187 = scmp.eq.s32.totalorder %s18, 1
    %p188 = por %p186, %p187
    %p189 = scmp.ne.s32.totalorder %s178, %s179
    %p190 = scmp.eq.s32.totalorder %s18, 0
    %p191 = por %p189, %p190
    %p192 = scmp.ne.s32.totalorder %s178, %s179
    %p193 = scmp.eq.s32.totalorder %s19, 1
    %p194 = por %p192, %p193
    %p196 = scmp.ne.s32.totalorder %s179, %s195
    %p197 = scmp.eq.s32.totalorder %s19, 0
    %p198 = por %p196, %p197
    %p199 = scmp.le.s32.totalorder 1, %s13
    %p200 = scmp.lt.s32.totalorder %s13, 3
    %p201 = pnand %p199, %p200
    %p202 = pneg %p201
    // Predicated region
    $region9: #{_ema_jit.1} parent=5 // pred_check
      _
    $region10: #{_ema_jit.1} parent=5 // pred_check_branch
      %204 = sbr.rel (%p201) target = $region12
    $region11: #{_ema_jit.1} parent=5 // pred_region
      %s205 = ssub.s32 %s13, 1
      // Predicated region
      $region13: #{_ema_jit.1} parent=11 // pred_check
        %p206 = pneg %p60
      $region14: #{_ema_jit.1} parent=11 // pred_check_branch
        %208 = sbr.rel (%p206) target = $region16
      $region15: #{_ema_jit.1} parent=11 // pred_region
        _
      $region16: #{_ema_jit.1} parent=11 // pred_fallthru
        _
      // Predicated region
      $region17: #{_ema_jit.1} parent=11 // pred_check
        %p209 = pneg %p81
      $region18: #{_ema_jit.1} parent=11 // pred_check_branch
        %211 = sbr.rel (%p209) target = $region20
      $region19: #{_ema_jit.1} parent=11 // pred_region
        _
      $region20: #{_ema_jit.1} parent=11 // pred_fallthru
        _
      // Predicated region
      $region21: #{_ema_jit.1} parent=11 // pred_check
        %p212 = pneg %p102
      $region22: #{_ema_jit.1} parent=11 // pred_check_branch
        %214 = sbr.rel (%p212) target = $region24
      $region23: #{_ema_jit.1} parent=11 // pred_region
        _
      $region24: #{_ema_jit.1} parent=11 // pred_fallthru
        _
      // Predicated region
      $region25: #{_ema_jit.1} parent=11 // pred_check
        %p215 = pneg %p123
      $region26: #{_ema_jit.1} parent=11 // pred_check_branch
        %217 = sbr.rel (%p215) target = $region28
      $region27: #{_ema_jit.1} parent=11 // pred_region
        _
      $region28: #{_ema_jit.1} parent=11 // pred_fallthru
        _
      // Predicated region
      $region29: #{_ema_jit.1} parent=11 // pred_check
        %p218 = pneg %p144
      $region30: #{_ema_jit.1} parent=11 // pred_check_branch
        %220 = sbr.rel (%p218) target = $region32
      $region31: #{_ema_jit.1} parent=11 // pred_region
        _
      $region32: #{_ema_jit.1} parent=11 // pred_fallthru
        _
      // Predicated region
      $region33: #{_ema_jit.1} parent=11 // pred_check
        %p221 = pneg %p165
      $region34: #{_ema_jit.1} parent=11 // pred_check_branch
        %223 = sbr.rel (%p221) target = $region36
      $region35: #{_ema_jit.1} parent=11 // pred_region
        _
      $region36: #{_ema_jit.1} parent=11 // pred_fallthru
        _
    $region12: #{_ema_jit.1} parent=5 // pred_fallthru
      _
    %p224 = scmp.lt.s32.totalorder %s13, 2
    // Predicated region
    $region37: #{_ema_jit.1} parent=5 // pred_check
      %p225 = pneg %p224
    $region38: #{_ema_jit.1} parent=5 // pred_check_branch
      %227 = sbr.rel (%p225) target = $region40
    $region39: #{_ema_jit.1} parent=5 // pred_region
      // Predicated region
      $region41: #{_ema_jit.1} parent=39 // pred_check
        %p228 = pneg %p33
      $region42: #{_ema_jit.1} parent=39 // pred_check_branch
        %230 = sbr.rel (%p228) target = $region44
      $region43: #{_ema_jit.1} parent=39 // pred_region
        %s231 = smul.u32 2, %s13
        %p232 = scmp.lt.s32.totalorder %s231, 3
        %s233 = scalar_select %p232, %s231, 3
        %s234 = smul.addr %s233, 2
        %s235 = smul.addr %s234, 8
        %s236 = scalar_lea.vmem %s0, %s235
        %s237 = smul.u32 2, %s13
      $region44: #{_ema_jit.1} parent=39 // pred_fallthru
        _
    $region40: #{_ema_jit.1} parent=5 // pred_fallthru
      _
    %p238 = scmp.le.s32.totalorder 1, %s13
    %p239 = scmp.lt.s32.totalorder %s13, 3
    %p240 = pnand %p238, %p239
    %p241 = pneg %p240
    // Predicated region
    $region45: #{_ema_jit.1} parent=5 // pred_check
      _
    $region46: #{_ema_jit.1} parent=5 // pred_check_branch
      %243 = sbr.rel (%p240) target = $region48
    $region47: #{_ema_jit.1} parent=5 // pred_region
      %s244 = ssub.s32 %s13, 1
      %s245 = smul.u32 2, %s18
      %p246 = scmp.lt.s32.totalorder %s245, 3
      %s247 = scalar_select %p246, %s245, 3
      %s248 = smul.addr %s247, 2
      %s249 = smul.addr %s248, 8
      %s250 = scalar_lea.vmem %s0, %s249
      %p251 = pneg %p39
      %p252 = pneg %p36
      %p253 = pneg %p60
      %p254 = pneg %p57
      %p255 = pneg %p81
      %p256 = pneg %p78
      %p257 = pneg %p102
      %p258 = pneg %p99
      %p259 = pneg %p123
      %p260 = pneg %p120
      %p261 = pneg %p144
      %p262 = pneg %p141
      %p263 = pneg %p165
      %p264 = pneg %p162
      %p265 = pneg %p191
      %p266 = pneg %p188
      %s267 = smul.u32 2, %s18
      %p268 = scmp.lt.s32.totalorder %s267, 3
      %s269 = scalar_select %p268, %s267, 3
      %s270 = smul.addr %s269, 2
      %s271 = smul.addr %s270, 8
      %s272 = scalar_lea.vmem %s7, %s271
      %s273 = smul.u32 2, %s18
      %p274 = scmp.lt.s32.totalorder %s273, 3
      %s275 = scalar_select %p274, %s273, 3
      %s276 = smul.addr %s275, 2
      %s277 = smul.addr %s276, 8
      %s278 = scalar_lea.vmem %s0, %s277
      %s279 = smul.u32 2, %s18
      %s280 = smul.u32 2, %s18
      %p281 = scmp.lt.s32.totalorder %s280, 3
      %s282 = scalar_select %p281, %s280, 3
      %s283 = smul.addr %s282, 2
      %s284 = smul.addr %s283, 8
      %s285 = scalar_lea.vmem %s7, %s284
      %s286 = smul.u32 2, %s18
      %v288 = vld [vmem:[%s278] sm:$0xff]
      %v289 = vld [vmem:[%s278 + $0x8] sm:$0xff]
      %v290 = vld [vmem:[%s278 + $0x10] sm:$0xff]
      %v291 = vld [vmem:[%s278 + $0x18] sm:$0xff]
      %v292 = vld [vmem:[%s3] sm:$0xff]
      %v293 = vld [vmem:[%s3 + $0x8] sm:$0xff]
      %v294 = vld [vmem:[%s4] sm:$0xff]
      %v295 = vld [vmem:[%s4 + $0x8] sm:$0xff]
      %v296 = vld [vmem:[%s4 + $0x10] sm:$0xff]
      %v297 = vld [vmem:[%s4 + $0x18] sm:$0xff]
      %v298 = vld [vmem:[%s4 + $0x20] sm:$0xff]
      %v299 = vld [vmem:[%s4 + $0x28] sm:$0xff]
      %v300 = vld [vmem:[%s4 + $0x30] sm:$0xff]
      %v301 = vld [vmem:[%s4 + $0x38] sm:$0xff]
      %v302 = vld [vmem:[%s4 + $0x40] sm:$0xff]
      %v303 = vld [vmem:[%s4 + $0x48] sm:$0xff]
      %v304 = vld [vmem:[%s4 + $0x50] sm:$0xff]
      %v305 = vld [vmem:[%s4 + $0x58] sm:$0xff]
      %v306 = vld [vmem:[%s4 + $0x60] sm:$0xff]
      %v307 = vld [vmem:[%s4 + $0x68] sm:$0xff]
      %v308 = vld [vmem:[%s4 + $0x70] sm:$0xff]
      %v309 = vld [vmem:[%s4 + $0x78] sm:$0xff]
      %310 = vmatprep.subr.mxu0 %v295
      %311 = vmatpush1.xpose.msra.mxu0 %v294
      %312 = vmatprep.subr.mxu0 %v297
      %313 = vmatpush1.xpose.msra.mxu0 %v296
      %314 = vmatprep.subr.mxu0 %v299
      %315 = vmatpush1.xpose.msra.mxu0 %v298
      %316 = vmatprep.subr.mxu0 %v301
      %317 = vmatpush1.xpose.msra.mxu0 %v300
      %318 = vmatprep.subr.mxu0 0.0
      %319 = vmatpush1.xpose.msra.mxu0 0.0
      %320 = vmatprep.subr.mxu0 0.0
      %321 = vmatpush1.xpose.msra.mxu0 0.0
      %322 = vmatprep.subr.mxu0 0.0
      %323 = vmatpush1.xpose.msra.mxu0 0.0
      %324 = vmatprep.subr.mxu0 0.0
      %325 = vmatpush1.xpose.msra.mxu0 0.0
      %326 = vmatprep.subr.mxu0 0.0
      %327 = vmatpush1.xpose.msra.mxu0 0.0
      %328 = vmatprep.subr.mxu0 0.0
      %329 = vmatpush1.xpose.msra.mxu0 0.0
      %330 = vmatprep.subr.mxu0 0.0
      %331 = vmatpush1.xpose.msra.mxu0 0.0
      %332 = vmatprep.subr.mxu0 0.0
      %333 = vmatpush1.xpose.msra.mxu0 0.0
      %334 = vmatprep.subr.mxu0 0.0
      %335 = vmatpush1.xpose.msra.mxu0 0.0
      %336 = vmatprep.subr.mxu0 0.0
      %337 = vmatpush1.xpose.msra.mxu0 0.0
      %338 = vmatprep.subr.mxu0 0.0
      %339 = vmatpush1.xpose.msra.mxu0 0.0
      %340 = vmatprep.subr.mxu0 0.0
      %341 = vmatpush1.xpose.msra.mxu0 0.0
      %342 = vmatprep.subr.mxu0 0.0
      %343 = vmatpush1.xpose.msra.mxu0 0.0
      %344 = vmatprep.subr.mxu0 0.0
      %345 = vmatpush1.xpose.msra.mxu0 0.0
      %346 = vmatprep.subr.mxu0 0.0
      %347 = vmatpush1.xpose.msra.mxu0 0.0
      %348 = vmatprep.subr.mxu0 0.0
      %349 = vmatpush1.xpose.msra.mxu0 0.0
      %350 = vmatprep.subr.mxu0 0.0
      %351 = vmatpush1.xpose.msra.mxu0 0.0
      %352 = vmatprep.subr.mxu0 0.0
      %353 = vmatpush1.xpose.msra.mxu0 0.0
      %354 = vmatprep.subr.mxu0 0.0
      %355 = vmatpush1.xpose.msra.mxu0 0.0
      %356 = vmatprep.subr.mxu0 0.0
      %357 = vmatpush1.xpose.msra.mxu0 0.0
      %358 = vmatprep.subr.mxu0 0.0
      %359 = vmatpush1.xpose.msra.mxu0 0.0
      %360 = vmatprep.subr.mxu0 0.0
      %361 = vmatpush1.xpose.msra.mxu0 0.0
      %362 = vmatprep.subr.mxu0 0.0
      %363 = vmatpush1.xpose.msra.mxu0 0.0
      %364 = vmatprep.subr.mxu0 0.0
      %365 = vmatpush1.xpose.msra.mxu0 0.0
      %366 = vmatprep.subr.mxu0 0.0
      %367 = vmatpush1.xpose.msra.mxu0 0.0
      %368 = vmatprep.subr.mxu0 0.0
      %369 = vmatpush1.xpose.msra.mxu0 0.0
      %370 = vmatprep.subr.mxu0 0.0
      %371 = vmatpush1.xpose.msra.mxu0 0.0
      %372 = vmatprep.subr.mxu0 0.0
      %373 = vmatpush1.xpose.msra.mxu0 0.0
      %374 = vmatprep.mubr.f32.mxu0 %v289
      %375 = vmatmul.mubr.f32.gmra.mrb[0].mxu0 %v288
      %v376 = vpop.f32.mrb[0].mxu0
      %v377 = vadd.f32 0.0, %v376
      %v378 = vpop.f32.mrb[0].mxu0
      %379 = vmatprep.mubr.f32.mxu0 %v291
      %380 = vmatmul.mubr.f32.gmra.mrb[0].mxu0 %v290
      %v381 = vpop.f32.mrb[0].mxu0
      %v382 = vadd.f32 0.0, %v381
      %v383 = vpop.f32.mrb[0].mxu0
      %384 = vdwg.mxu0
      %v385 = vld [vmem:[%s1] sm:$0xff]
      %v386 = vld [vmem:[%s1 + $0x8] sm:$0xff]
      %388 = vset.pattern.permute.xlu0 0
      %389 = vperm.xlu0 %388, %v292
      %v390 = vpop.permute.xlu0 %389
      %393 = vset.pattern.permute.xlu0 0
      %394 = vperm.xlu0 %393, %v293
      %v395 = vpop.permute.xlu0 %394
      %vm397 = vcmask 130048
      %v399 = vsel %vm397, %v385, 0
      %v402 = vsel %vm397, %v386, 0
      %404 = vmatprep.subr.mxu0 0.0
      %405 = vmatpush1.msra.mxu0 %v377
      %406 = vmatprep.subr.mxu0 0.0
      %407 = vmatpush1.msra.mxu0 %v382
      %408 = vmatprep.subr.mxu0 0.0
      %409 = vmatpush1.msra.mxu0 0.0
      %410 = vmatprep.subr.mxu0 0.0
      %411 = vmatpush1.msra.mxu0 0.0
      %412 = vmatprep.subr.mxu0 0.0
      %413 = vmatpush1.msra.mxu0 0.0
      %414 = vmatprep.subr.mxu0 0.0
      %415 = vmatpush1.msra.mxu0 0.0
      %416 = vmatprep.subr.mxu0 0.0
      %417 = vmatpush1.msra.mxu0 0.0
      %418 = vmatprep.subr.mxu0 0.0
      %419 = vmatpush1.msra.mxu0 0.0
      %420 = vmatprep.subr.mxu0 0.0
      %421 = vmatpush1.msra.mxu0 0.0
      %422 = vmatprep.subr.mxu0 0.0
      %423 = vmatpush1.msra.mxu0 0.0
      %424 = vmatprep.subr.mxu0 0.0
      %425 = vmatpush1.msra.mxu0 0.0
      %426 = vmatprep.subr.mxu0 0.0
      %427 = vmatpush1.msra.mxu0 0.0
      %428 = vmatprep.subr.mxu0 0.0
      %429 = vmatpush1.msra.mxu0 0.0
      %430 = vmatprep.subr.mxu0 0.0
      %431 = vmatpush1.msra.mxu0 0.0
      %432 = vmatprep.subr.mxu0 0.0
      %433 = vmatpush1.msra.mxu0 0.0
      %434 = vmatprep.subr.mxu0 0.0
      %435 = vmatpush1.msra.mxu0 0.0
      %436 = vmatprep.subr.mxu0 0.0
      %437 = vmatpush1.msra.mxu0 0.0
      %438 = vmatprep.subr.mxu0 0.0
      %439 = vmatpush1.msra.mxu0 0.0
      %440 = vmatprep.subr.mxu0 0.0
      %441 = vmatpush1.msra.mxu0 0.0
      %442 = vmatprep.subr.mxu0 0.0
      %443 = vmatpush1.msra.mxu0 0.0
      %444 = vmatprep.subr.mxu0 0.0
      %445 = vmatpush1.msra.mxu0 0.0
      %446 = vmatprep.subr.mxu0 0.0
      %447 = vmatpush1.msra.mxu0 0.0
      %448 = vmatprep.subr.mxu0 0.0
      %449 = vmatpush1.msra.mxu0 0.0
      %450 = vmatprep.subr.mxu0 0.0
      %451 = vmatpush1.msra.mxu0 0.0
      %452 = vmatprep.subr.mxu0 0.0
      %453 = vmatpush1.msra.mxu0 0.0
      %454 = vmatprep.subr.mxu0 0.0
      %455 = vmatpush1.msra.mxu0 0.0
      %456 = vmatprep.subr.mxu0 0.0
      %457 = vmatpush1.msra.mxu0 0.0
      %458 = vmatprep.subr.mxu0 0.0
      %459 = vmatpush1.msra.mxu0 0.0
      %460 = vmatprep.subr.mxu0 0.0
      %461 = vmatpush1.msra.mxu0 0.0
      %462 = vmatprep.subr.mxu0 0.0
      %463 = vmatpush1.msra.mxu0 0.0
      %464 = vmatprep.subr.mxu0 0.0
      %465 = vmatpush1.msra.mxu0 0.0
      %466 = vmatprep.subr.mxu0 0.0
      %467 = vmatpush1.msra.mxu0 0.0
      %468 = vmatprep.mubr.f32.mxu0 0.0
      %469 = vmatmul.mubr.f32.gmra.mrb[0].mxu0 %v399
      %v470 = vpop.f32.mrb[0].mxu0
      %v471 = vadd.f32 %v390, %v470
      %v472 = vpop.f32.mrb[0].mxu0
      %473 = vmatprep.mubr.f32.mxu0 0.0
      %474 = vmatmul.mubr.f32.gmra.mrb[0].mxu0 %v402
      %v475 = vpop.f32.mrb[0].mxu0
      %v476 = vadd.f32 %v395, %v475
      %v477 = vpop.f32.mrb[0].mxu0
      %478 = vdwg.mxu0
      %v479 = vxor.u32 %v471, 2147483648
      %v480 = vxor.u32 %v476, 2147483648
      %v481 = vmul.f32 %v479, 1.442695
      %v482 = vpow.pop %v481
      %v483 = vmul.f32 %v480, 1.442695
      %v484 = vpow.pop %v483
      %v485 = vadd.f32 %v482, 1.0
      %v486 = vadd.f32 %v484, 1.0
      %v487 = vrcp.pop %v485
      %v488 = vmul.f32 1.0, %v487
      %v489 = vrcp.pop %v486
      %v490 = vmul.f32 1.0, %v489
      %v492 = vsel %vm397, %v488, 0
      %v495 = vsel %vm397, %v490, 0
      %497 = vmatprep.subr.mxu0 %v303
      %498 = vmatpush1.msra.mxu0 %v302
      %499 = vmatprep.subr.mxu0 %v305
      %500 = vmatpush1.msra.mxu0 %v304
      %501 = vmatprep.subr.mxu0 0.0
      %502 = vmatpush1.msra.mxu0 0.0
      %503 = vmatprep.subr.mxu0 0.0
      %504 = vmatpush1.msra.mxu0 0.0
      %505 = vmatprep.subr.mxu0 0.0
      %506 = vmatpush1.msra.mxu0 0.0
      %507 = vmatprep.subr.mxu0 0.0
      %508 = vmatpush1.msra.mxu0 0.0
      %509 = vmatprep.subr.mxu0 0.0
      %510 = vmatpush1.msra.mxu0 0.0
      %511 = vmatprep.subr.mxu0 0.0
      %512 = vmatpush1.msra.mxu0 0.0
      %513 = vmatprep.subr.mxu0 0.0
      %514 = vmatpush1.msra.mxu0 0.0
      %515 = vmatprep.subr.mxu0 0.0
      %516 = vmatpush1.msra.mxu0 0.0
      %517 = vmatprep.subr.mxu0 0.0
      %518 = vmatpush1.msra.mxu0 0.0
      %519 = vmatprep.subr.mxu0 0.0
      %520 = vmatpush1.msra.mxu0 0.0
      %521 = vmatprep.subr.mxu0 0.0
      %522 = vmatpush1.msra.mxu0 0.0
      %523 = vmatprep.subr.mxu0 0.0
      %524 = vmatpush1.msra.mxu0 0.0
      %525 = vmatprep.subr.mxu0 0.0
      %526 = vmatpush1.msra.mxu0 0.0
      %527 = vmatprep.subr.mxu0 0.0
      %528 = vmatpush1.msra.mxu0 0.0
      %529 = vmatprep.subr.mxu0 0.0
      %530 = vmatpush1.msra.mxu0 0.0
      %531 = vmatprep.subr.mxu0 0.0
      %532 = vmatpush1.msra.mxu0 0.0
      %533 = vmatprep.subr.mxu0 0.0
      %534 = vmatpush1.msra.mxu0 0.0
      %535 = vmatprep.subr.mxu0 0.0
      %536 = vmatpush1.msra.mxu0 0.0
      %537 = vmatprep.subr.mxu0 0.0
      %538 = vmatpush1.msra.mxu0 0.0
      %539 = vmatprep.subr.mxu0 0.0
      %540 = vmatpush1.msra.mxu0 0.0
      %541 = vmatprep.subr.mxu0 0.0
      %542 = vmatpush1.msra.mxu0 0.0
      %543 = vmatprep.subr.mxu0 0.0
      %544 = vmatpush1.msra.mxu0 0.0
      %545 = vmatprep.subr.mxu0 0.0
      %546 = vmatpush1.msra.mxu0 0.0
      %547 = vmatprep.subr.mxu0 0.0
      %548 = vmatpush1.msra.mxu0 0.0
      %549 = vmatprep.subr.mxu0 0.0
      %550 = vmatpush1.msra.mxu0 0.0
      %551 = vmatprep.subr.mxu0 0.0
      %552 = vmatpush1.msra.mxu0 0.0
      %553 = vmatprep.subr.mxu0 0.0
      %554 = vmatpush1.msra.mxu0 0.0
      %555 = vmatprep.subr.mxu0 0.0
      %556 = vmatpush1.msra.mxu0 0.0
      %557 = vmatprep.subr.mxu0 0.0
      %558 = vmatpush1.msra.mxu0 0.0
      %559 = vmatprep.subr.mxu0 0.0
      %560 = vmatpush1.msra.mxu0 0.0
      %561 = vmatprep.mubr.f32.mxu0 0.0
      %562 = vmatmul.mubr.f32.gmra.mrb[0].mxu0 %v492
      %v563 = vpop.f32.mrb[0].mxu0
      %v564 = vadd.f32 0.0, %v563
      %v565 = vpop.f32.mrb[0].mxu0
      %v566 = vadd.f32 0.0, %v565
      %567 = vmatprep.mubr.f32.mxu0 0.0
      %568 = vmatmul.mubr.f32.gmra.mrb[0].mxu0 %v495
      %v569 = vpop.f32.mrb[0].mxu0
      %v570 = vadd.f32 0.0, %v569
      %v571 = vpop.f32.mrb[0].mxu0
      %v572 = vadd.f32 0.0, %v571
      %573 = vdwg.mxu0
      %574 = vrot.lane.b32.xlu0 %v488, 112
      %v575 = vpop.permute.xlu0 %574
      %576 = vrot.lane.b32.xlu0 %v490, 112
      %v577 = vpop.permute.xlu0 %576
      %v578 = vsel %vm397, %v575, 0
      %v580 = vsel %vm397, %v577, 0
      %582 = vmatprep.subr.mxu0 %v307
      %583 = vmatpush1.msra.mxu0 %v306
      %584 = vmatprep.subr.mxu0 %v309
      %585 = vmatpush1.msra.mxu0 %v308
      %586 = vmatprep.subr.mxu0 0.0
      %587 = vmatpush1.msra.mxu0 0.0
      %588 = vmatprep.subr.mxu0 0.0
      %589 = vmatpush1.msra.mxu0 0.0
      %590 = vmatprep.subr.mxu0 0.0
      %591 = vmatpush1.msra.mxu0 0.0
      %592 = vmatprep.subr.mxu0 0.0
      %593 = vmatpush1.msra.mxu0 0.0
      %594 = vmatprep.subr.mxu0 0.0
      %595 = vmatpush1.msra.mxu0 0.0
      %596 = vmatprep.subr.mxu0 0.0
      %597 = vmatpush1.msra.mxu0 0.0
      %598 = vmatprep.subr.mxu0 0.0
      %599 = vmatpush1.msra.mxu0 0.0
      %600 = vmatprep.subr.mxu0 0.0
      %601 = vmatpush1.msra.mxu0 0.0
      %602 = vmatprep.subr.mxu0 0.0
      %603 = vmatpush1.msra.mxu0 0.0
      %604 = vmatprep.subr.mxu0 0.0
      %605 = vmatpush1.msra.mxu0 0.0
      %606 = vmatprep.subr.mxu0 0.0
      %607 = vmatpush1.msra.mxu0 0.0
      %608 = vmatprep.subr.mxu0 0.0
      %609 = vmatpush1.msra.mxu0 0.0
      %610 = vmatprep.subr.mxu0 0.0
      %611 = vmatpush1.msra.mxu0 0.0
      %612 = vmatprep.subr.mxu0 0.0
      %613 = vmatpush1.msra.mxu0 0.0
      %614 = vmatprep.subr.mxu0 0.0
      %615 = vmatpush1.msra.mxu0 0.0
      %616 = vmatprep.subr.mxu0 0.0
      %617 = vmatpush1.msra.mxu0 0.0
      %618 = vmatprep.subr.mxu0 0.0
      %619 = vmatpush1.msra.mxu0 0.0
      %620 = vmatprep.subr.mxu0 0.0
      %621 = vmatpush1.msra.mxu0 0.0
      %622 = vmatprep.subr.mxu0 0.0
      %623 = vmatpush1.msra.mxu0 0.0
      %624 = vmatprep.subr.mxu0 0.0
      %625 = vmatpush1.msra.mxu0 0.0
      %626 = vmatprep.subr.mxu0 0.0
      %627 = vmatpush1.msra.mxu0 0.0
      %628 = vmatprep.subr.mxu0 0.0
      %629 = vmatpush1.msra.mxu0 0.0
      %630 = vmatprep.subr.mxu0 0.0
      %631 = vmatpush1.msra.mxu0 0.0
      %632 = vmatprep.subr.mxu0 0.0
      %633 = vmatpush1.msra.mxu0 0.0
      %634 = vmatprep.subr.mxu0 0.0
      %635 = vmatpush1.msra.mxu0 0.0
      %636 = vmatprep.subr.mxu0 0.0
      %637 = vmatpush1.msra.mxu0 0.0
      %638 = vmatprep.subr.mxu0 0.0
      %639 = vmatpush1.msra.mxu0 0.0
      %640 = vmatprep.subr.mxu0 0.0
      %641 = vmatpush1.msra.mxu0 0.0
      %642 = vmatprep.subr.mxu0 0.0
      %643 = vmatpush1.msra.mxu0 0.0
      %644 = vmatprep.subr.mxu0 0.0
      %645 = vmatpush1.msra.mxu0 0.0
      %646 = vmatprep.mubr.f32.mxu0 0.0
      %647 = vmatmul.mubr.f32.gmra.mrb[0].mxu0 %v578
      %v648 = vpop.f32.mrb[0].mxu0
      %v649 = vadd.f32 0.0, %v648
      %v650 = vpop.f32.mrb[0].mxu0
      %v651 = vadd.f32 0.0, %v650
      %652 = vmatprep.mubr.f32.mxu0 0.0
      %653 = vmatmul.mubr.f32.gmra.mrb[0].mxu0 %v580
      %v654 = vpop.f32.mrb[0].mxu0
      %v655 = vadd.f32 0.0, %v654
      %v656 = vpop.f32.mrb[0].mxu0
      %v657 = vadd.f32 0.0, %v656
      %658 = vdwg.mxu0
      %v659 = vmul.f32 %v564, %v649
      %v660 = vmul.f32 %v566, %v651
      %v661 = vmul.f32 %v570, %v655
      %v662 = vmul.f32 %v572, %v657
      %v663 = vmul.f32 %v288, %v659
      %v664 = vmul.f32 %v289, %v660
      %v665 = vmul.f32 %v290, %v661
      %v666 = vmul.f32 %v291, %v662
      %v667 = vadd.f32 %v663, %v664
      %668 = vadd.xlane.f32.xlu0 %v667
      %v669 = vpop.xlane.xlu0 %668
      %v670 = vadd.f32 %v665, %v666
      %671 = vadd.xlane.f32.xlu0 %v670
      %v672 = vpop.xlane.xlu0 %671
      %v673 = vrcp.pop 256.0
      %v674 = vmul.f32 %v669, %v673
      %v675 = vmul.f32 %v672, %v673
      %v676 = vsub.f32 %v663, %v674
      %v677 = vsub.f32 %v664, %v674
      %v678 = vsub.f32 %v665, %v675
      %v679 = vsub.f32 %v666, %v675
      %v680 = vmul.f32 %v676, %v676
      %v681 = vmul.f32 %v677, %v677
      %v682 = vmul.f32 %v678, %v678
      %v683 = vmul.f32 %v679, %v679
      %v684 = vadd.f32 %v680, %v681
      %685 = vadd.xlane.f32.xlu0 %v684
      %v686 = vpop.xlane.xlu0 %685
      %v687 = vadd.f32 %v682, %v683
      %688 = vadd.xlane.f32.xlu0 %v687
      %v689 = vpop.xlane.xlu0 %688
      %v690 = vmul.f32 %v686, %v673
      %v691 = vmul.f32 %v689, %v673
      %v692 = vadd.f32 %v690, 1e-05
      %v693 = vadd.f32 %v691, 1e-05
      %v694 = vrsqrt.pop %v692
      %v695 = vrsqrt.pop %v693
      %v696 = vmul.f32 %v676, %v694
      %v697 = vmul.f32 %v677, %v694
      %v698 = vmul.f32 %v678, %v695
      %v699 = vmul.f32 %v679, %v695
      %700 = vset.pattern.permute.xlu0 2
      %701 = vperm.xlu0 %700, %v292
      %v702 = vpop.permute.xlu0 %701
      %704 = vset.pattern.permute.xlu0 2
      %705 = vperm.xlu0 %704, %v293
      %v706 = vpop.permute.xlu0 %705
      %v708 = vmul.f32 %v696, %v702
      %v709 = vmul.f32 %v697, %v702
      %v710 = vmul.f32 %v698, %v706
      %v711 = vmul.f32 %v699, %v706
      %712 = vset.pattern.permute.xlu0 3
      %713 = vperm.xlu0 %712, %v292
      %v714 = vpop.permute.xlu0 %713
      %716 = vset.pattern.permute.xlu0 3
      %717 = vperm.xlu0 %716, %v293
      %v718 = vpop.permute.xlu0 %717
      %v720 = vadd.f32 %v708, %v714
      %v721 = vadd.f32 %v709, %v714
      %v722 = vadd.f32 %v710, %v718
      %v723 = vadd.f32 %v711, %v718
      %v724 = vld [vmem:[%s5] sm:$0xff]
      %v725 = vld [vmem:[%s5 + $0x8] sm:$0xff]
      %v726 = vld [vmem:[%s5 + $0x10] sm:$0x1]
      %v727 = vld [vmem:[%s5 + $0x18] sm:$0x1]
      %730 = vrot.lane.b32.xlu0 %v289, 17
      %v731 = vpop.permute.xlu0 %730
      %732 = vrot.lane.b32.xlu0 %v291, 17
      %v733 = vpop.permute.xlu0 %732
      %738 = vrot.lane.b32.xlu0 %v288, 17
      %v739 = vpop.permute.xlu0 %738
      %740 = vrot.lane.b32.xlu0 %v290, 17
      %v741 = vpop.permute.xlu0 %740
      %vm742 = vcmask 138240
      %v743 = vsel %vm742, %v739, %v731
      %v744 = vsel %vm742, %v741, %v733
      %v749 = vsel %vm742, %v731, %v739
      %v750 = vsel %vm742, %v733, %v741
      %v751 = vlaneseq
      %v752 = vshrl.u32 %v751, 7
      %v753 = vsub.s32 0, %v752
      %v754 = vrot.slane %v724, %v753
      %v755 = vlaneseq
      %v756 = vshrl.u32 %v755, 7
      %v757 = vsub.s32 0, %v756
      %v758 = vrot.slane %v725, %v757
      %v759 = vmul.f32 %v749, %v754
      %v760 = vmul.f32 %v743, %v758
      %v761 = vmul.f32 %v750, %v754
      %v762 = vmul.f32 %v744, %v758
      %v763 = vpack.c.bf16 %v761, %v759
      %v764 = vpack.c.bf16 %v762, %v760
      %765 = vst [vmem:[#allocation2] sm:$0xff] %v763
      %766 = vst [vmem:[#allocation2 + $0x8] sm:$0xff] %v764
      %767 = vrot.lane.b32.xlu0 %v289, 16
      %v768 = vpop.permute.xlu0 %767
      %769 = vrot.lane.b32.xlu0 %v291, 16
      %v770 = vpop.permute.xlu0 %769
      %773 = vrot.lane.b32.xlu0 %v288, 16
      %v774 = vpop.permute.xlu0 %773
      %775 = vrot.lane.b32.xlu0 %v290, 16
      %v776 = vpop.permute.xlu0 %775
      %v777 = vsel %vm397, %v774, %v768
      %v778 = vsel %vm397, %v776, %v770
      %v783 = vsel %vm397, %v768, %v774
      %v784 = vsel %vm397, %v770, %v776
      %v785 = vlaneseq
      %v786 = vshrl.u32 %v785, 7
      %v787 = vsub.s32 1, %v786
      %v788 = vrot.slane %v724, %v787
      %v789 = vlaneseq
      %v790 = vshrl.u32 %v789, 7
      %v791 = vsub.s32 1, %v790
      %v792 = vrot.slane %v725, %v791
      %v793 = vmul.f32 %v783, %v788
      %v794 = vmul.f32 %v777, %v792
      %v795 = vmul.f32 %v784, %v788
      %v796 = vmul.f32 %v778, %v792
      %v797 = vpack.c.bf16 %v795, %v793
      %v798 = vpack.c.bf16 %v796, %v794
      %799 = vst [vmem:[#allocation2 + $0x10] sm:$0xff] %v797
      %800 = vst [vmem:[#allocation2 + $0x18] sm:$0xff] %v798
      %801 = vrot.lane.b32.xlu0 %v289, 15
      %v802 = vpop.permute.xlu0 %801
      %803 = vrot.lane.b32.xlu0 %v291, 15
      %v804 = vpop.permute.xlu0 %803
      %807 = vrot.lane.b32.xlu0 %v288, 15
      %v808 = vpop.permute.xlu0 %807
      %809 = vrot.lane.b32.xlu0 %v290, 15
      %v810 = vpop.permute.xlu0 %809
      %vm811 = vcmask 121856
      %v812 = vsel %vm811, %v808, %v802
      %v813 = vsel %vm811, %v810, %v804
      %v818 = vsel %vm811, %v802, %v808
      %v819 = vsel %vm811, %v804, %v810
      %v820 = vlaneseq
      %v821 = vshrl.u32 %v820, 7
      %v822 = vsub.s32 2, %v821
      %v823 = vrot.slane %v724, %v822
      %v824 = vlaneseq
      %v825 = vshrl.u32 %v824, 7
      %v826 = vsub.s32 2, %v825
      %v827 = vrot.slane %v725, %v826
      %v828 = vmul.f32 %v818, %v823
      %v829 = vmul.f32 %v812, %v827
      %v830 = vmul.f32 %v819, %v823
      %v831 = vmul.f32 %v813, %v827
      %v832 = vpack.c.bf16 %v830, %v828
      %v833 = vpack.c.bf16 %v831, %v829
      %834 = vst [vmem:[#allocation2 + $0x20] sm:$0xff] %v832
      %835 = vst [vmem:[#allocation2 + $0x28] sm:$0xff] %v833
      %836 = vrot.lane.b32.xlu0 %v289, 1
      %v837 = vpop.permute.xlu0 %836
      %838 = vrot.lane.b32.xlu0 %v291, 1
      %v839 = vpop.permute.xlu0 %838
      %842 = vrot.lane.b32.xlu0 %v288, 1
      %v843 = vpop.permute.xlu0 %842
      %844 = vrot.lane.b32.xlu0 %v290, 1
      %v845 = vpop.permute.xlu0 %844
      %vm846 = vcmask 7168
      %v847 = vsel %vm846, %v843, %v837
      %v848 = vsel %vm846, %v845, %v839
      %v853 = vsel %vm846, %v837, %v843
      %v854 = vsel %vm846, %v839, %v845
      %v855 = vlaneseq
      %v856 = vshrl.u32 %v855, 7
      %v857 = vsub.s32 3, %v856
      %v858 = vrot.slane %v724, %v857
      %v859 = vlaneseq
      %v860 = vshrl.u32 %v859, 7
      %v861 = vsub.s32 3, %v860
      %v862 = vrot.slane %v725, %v861
      %v863 = vmul.f32 %v853, %v858
      %v864 = vmul.f32 %v847, %v862
      %v865 = vmul.f32 %v854, %v858
      %v866 = vmul.f32 %v848, %v862
      %v867 = vpack.c.bf16 %v865, %v863
      %v868 = vpack.c.bf16 %v866, %v864
      %869 = vst [vmem:[#allocation2 + $0x30] sm:$0xff] %v867
      %870 = vst [vmem:[#allocation2 + $0x38] sm:$0xff] %v868
      %v871 = vlaneseq
      %v872 = vshrl.u32 %v871, 7
      %v873 = vsub.s32 4, %v872
      %v874 = vrot.slane %v724, %v873
      %v875 = vlaneseq
      %v876 = vshrl.u32 %v875, 7
      %v877 = vsub.s32 4, %v876
      %v878 = vrot.slane %v725, %v877
      %v879 = vmul.f32 %v288, %v874
      %v880 = vmul.f32 %v289, %v878
      %v881 = vmul.f32 %v290, %v874
      %v882 = vmul.f32 %v291, %v878
      %v883 = vpack.c.bf16 %v881, %v879
      %v884 = vpack.c.bf16 %v882, %v880
      %885 = vst [vmem:[#allocation2 + $0x40] sm:$0xff] %v883
      %886 = vst [vmem:[#allocation2 + $0x48] sm:$0xff] %v884
      %887 = vrot.lane.b32.xlu0 %v288, 127
      %v888 = vpop.permute.xlu0 %887
      %889 = vrot.lane.b32.xlu0 %v289, 127
      %v890 = vpop.permute.xlu0 %889
      %891 = vrot.lane.b32.xlu0 %v290, 127
      %v892 = vpop.permute.xlu0 %891
      %893 = vrot.lane.b32.xlu0 %v291, 127
      %v894 = vpop.permute.xlu0 %893
      %vm895 = vcmask 1039360
      %v896 = vsel %vm895, %v888, %v890
      %v897 = vsel %vm895, %v892, %v894
      %v904 = vsel %vm895, %v890, %v888
      %v905 = vsel %vm895, %v894, %v892
      %v906 = vlaneseq
      %v907 = vshrl.u32 %v906, 7
      %v908 = vsub.s32 5, %v907
      %v909 = vrot.slane %v724, %v908
      %v910 = vlaneseq
      %v911 = vshrl.u32 %v910, 7
      %v912 = vsub.s32 5, %v911
      %v913 = vrot.slane %v725, %v912
      %v914 = vmul.f32 %v896, %v909
      %v915 = vmul.f32 %v904, %v913
      %v916 = vmul.f32 %v897, %v909
      %v917 = vmul.f32 %v905, %v913
      %v918 = vpack.c.bf16 %v916, %v914
      %v919 = vpack.c.bf16 %v917, %v915
      %920 = vst [vmem:[#allocation2 + $0x50] sm:$0xff] %v918
      %921 = vst [vmem:[#allocation2 + $0x58] sm:$0xff] %v919
      %922 = vrot.lane.b32.xlu0 %v288, 113
      %v923 = vpop.permute.xlu0 %922
      %924 = vrot.lane.b32.xlu0 %v289, 113
      %v925 = vpop.permute.xlu0 %924
      %926 = vrot.lane.b32.xlu0 %v290, 113
      %v927 = vpop.permute.xlu0 %926
      %928 = vrot.lane.b32.xlu0 %v291, 113
      %v929 = vpop.permute.xlu0 %928
      %vm930 = vcmask 924672
      %v931 = vsel %vm930, %v923, %v925
      %v932 = vsel %vm930, %v927, %v929
      %v939 = vsel %vm930, %v925, %v923
      %v940 = vsel %vm930, %v929, %v927
      %v941 = vlaneseq
      %v942 = vshrl.u32 %v941, 7
      %v943 = vsub.s32 6, %v942
      %v944 = vrot.slane %v724, %v943
      %v945 = vlaneseq
      %v946 = vshrl.u32 %v945, 7
      %v947 = vsub.s32 6, %v946
      %v948 = vrot.slane %v725, %v947
      %v949 = vmul.f32 %v931, %v944
      %v950 = vmul.f32 %v939, %v948
      %v951 = vmul.f32 %v932, %v944
      %v952 = vmul.f32 %v940, %v948
      %v953 = vpack.c.bf16 %v951, %v949
      %v954 = vpack.c.bf16 %v952, %v950
      %955 = vst [vmem:[#allocation2 + $0x60] sm:$0xff] %v953
      %956 = vst [vmem:[#allocation2 + $0x68] sm:$0xff] %v954
      %957 = vrot.lane.b32.xlu0 %v288, 112
      %v958 = vpop.permute.xlu0 %957
      %959 = vrot.lane.b32.xlu0 %v289, 112
      %v960 = vpop.permute.xlu0 %959
      %961 = vrot.lane.b32.xlu0 %v290, 112
      %v962 = vpop.permute.xlu0 %961
      %963 = vrot.lane.b32.xlu0 %v291, 112
      %v964 = vpop.permute.xlu0 %963
      %vm965 = vcmask 916480
      %v966 = vsel %vm965, %v958, %v960
      %v967 = vsel %vm965, %v962, %v964
      %v974 = vsel %vm965, %v960, %v958
      %v975 = vsel %vm965, %v964, %v962
      %v976 = vlaneseq
      %v977 = vshrl.u32 %v976, 7
      %v978 = vsub.s32 7, %v977
      %v979 = vrot.slane %v724, %v978
      %v980 = vlaneseq
      %v981 = vshrl.u32 %v980, 7
      %v982 = vsub.s32 7, %v981
      %v983 = vrot.slane %v725, %v982
      %v984 = vmul.f32 %v966, %v979
      %v985 = vmul.f32 %v974, %v983
      %v986 = vmul.f32 %v967, %v979
      %v987 = vmul.f32 %v975, %v983
      %v988 = vpack.c.bf16 %v986, %v984
      %v989 = vpack.c.bf16 %v987, %v985
      %990 = vst [vmem:[#allocation2 + $0x70] sm:$0xff] %v988
      %991 = vst [vmem:[#allocation2 + $0x78] sm:$0xff] %v989
      %992 = vrot.lane.b32.xlu0 %v288, 111
      %v993 = vpop.permute.xlu0 %992
      %994 = vrot.lane.b32.xlu0 %v289, 111
      %v995 = vpop.permute.xlu0 %994
      %996 = vrot.lane.b32.xlu0 %v290, 111
      %v997 = vpop.permute.xlu0 %996
      %998 = vrot.lane.b32.xlu0 %v291, 111
      %v999 = vpop.permute.xlu0 %998
      %vm1000 = vcmask 908288
      %v1001 = vsel %vm1000, %v993, %v995
      %v1002 = vsel %vm1000, %v997, %v999
      %v1009 = vsel %vm1000, %v995, %v993
      %v1010 = vsel %vm1000, %v999, %v997
      %v1011 = vlaneseq
      %v1012 = vshrl.u32 %v1011, 7
      %v1013 = vsub.s32 0, %v1012
      %v1014 = vrot.slane %v726, %v1013
      %v1015 = vlaneseq
      %v1016 = vshrl.u32 %v1015, 7
      %v1017 = vsub.s32 0, %v1016
      %v1018 = vrot.slane %v727, %v1017
      %v1019 = vmul.f32 %v1001, %v1014
      %v1020 = vmul.f32 %v1009, %v1018
      %v1021 = vmul.f32 %v1002, %v1014
      %v1022 = vmul.f32 %v1010, %v1018
      %v1023 = vpack.c.bf16 %v1021, %v1019
      %v1024 = vpack.c.bf16 %v1022, %v1020
      %1025 = vst [vmem:[#allocation2 + $0x80] sm:$0xff] %v1023
      %1026 = vst [vmem:[#allocation2 + $0x88] sm:$0xff] %v1024
      %v1027 = vld [vmem:[%s2] sm:$0xff]
      %v1028 = vld [vmem:[%s2 + $0x8] sm:$0xff]
      %v1029 = vld [vmem:[#allocation2] sm:$0xff]
      %v1030 = vld [vmem:[#allocation2 + $0x8] sm:$0xff]
      %v1031 = vld [vmem:[#allocation2 + $0x10] sm:$0xff]
      %v1032 = vld [vmem:[#allocation2 + $0x18] sm:$0xff]
      %v1033 = vld [vmem:[#allocation2 + $0x20] sm:$0xff]
      %v1034 = vld [vmem:[#allocation2 + $0x28] sm:$0xff]
      %v1035 = vld [vmem:[#allocation2 + $0x30] sm:$0xff]
      %v1036 = vld [vmem:[#allocation2 + $0x38] sm:$0xff]
      %v1037 = vld [vmem:[#allocation2 + $0x40] sm:$0xff]
      %v1038 = vld [vmem:[#allocation2 + $0x48] sm:$0xff]
      %v1039 = vld [vmem:[#allocation2 + $0x50] sm:$0xff]
      %v1040 = vld [vmem:[#allocation2 + $0x58] sm:$0xff]
      %v1041 = vld [vmem:[#allocation2 + $0x60] sm:$0xff]
      %v1042 = vld [vmem:[#allocation2 + $0x68] sm:$0xff]
      %v1043 = vld [vmem:[#allocation2 + $0x70] sm:$0xff]
      %v1044 = vld [vmem:[#allocation2 + $0x78] sm:$0xff]
      %v1045 = vld [vmem:[#allocation2 + $0x80] sm:$0xff]
      %v1046 = vld [vmem:[#allocation2 + $0x88] sm:$0xff]
      %1047 = vset.pattern.permute.xlu0 1
      %1048 = vperm.xlu0 %1047, %v292
      %v1049 = vpop.permute.xlu0 %1048
      %1051 = vset.pattern.permute.xlu0 1
      %1052 = vperm.xlu0 %1051, %v293
      %v1053 = vpop.permute.xlu0 %1052
      %v1057 = vunpack.c.l.b16 %v1027
      %v1058 = vunpack.c.h.b16 %v1027
      %v1059 = vunpack.c.l.b16 %v1028
      %v1060 = vunpack.c.h.b16 %v1028
      %v1061 = vpack.c.b16 %v1059, %v1057
      %v1062 = vpack.c.b16 %v1060, %v1058
      %v1065 = vsel %vm397, %v1062, 0
      %1067 = vmatprep.subr.bf16.mxu0 %v1030
      %1068 = vmatpush1.bf16.msra.mxu0 %v1029
      %1069 = vmatprep.subr.bf16.mxu0 %v1032
      %1070 = vmatpush1.bf16.msra.mxu0 %v1031
      %1071 = vmatprep.subr.bf16.mxu0 %v1034
      %1072 = vmatpush1.bf16.msra.mxu0 %v1033
      %1073 = vmatprep.subr.bf16.mxu0 %v1036
      %1074 = vmatpush1.bf16.msra.mxu0 %v1035
      %1075 = vmatprep.subr.bf16.mxu0 %v1038
      %1076 = vmatpush1.bf16.msra.mxu0 %v1037
      %1077 = vmatprep.subr.bf16.mxu0 %v1040
      %1078 = vmatpush1.bf16.msra.mxu0 %v1039
      %1079 = vmatprep.subr.bf16.mxu0 %v1042
      %1080 = vmatpush1.bf16.msra.mxu0 %v1041
      %1081 = vmatprep.subr.bf16.mxu0 %v1044
      %1082 = vmatpush1.bf16.msra.mxu0 %v1043
      %1083 = vmatprep.subr.bf16.mxu0 %v1046
      %1084 = vmatpush1.bf16.msra.mxu0 %v1045
      %1085 = vmatprep.subr.bf16.mxu0 0
      %1086 = vmatpush1.bf16.msra.mxu0 0
      %1087 = vmatprep.subr.bf16.mxu0 0
      %1088 = vmatpush1.bf16.msra.mxu0 0
      %1089 = vmatprep.subr.bf16.mxu0 0
      %1090 = vmatpush1.bf16.msra.mxu0 0
      %1091 = vmatprep.subr.bf16.mxu0 0
      %1092 = vmatpush1.bf16.msra.mxu0 0
      %1093 = vmatprep.subr.bf16.mxu0 0
      %1094 = vmatpush1.bf16.msra.mxu0 0
      %1095 = vmatprep.subr.bf16.mxu0 0
      %1096 = vmatpush1.bf16.msra.mxu0 0
      %1097 = vmatprep.subr.bf16.mxu0 0
      %1098 = vmatpush1.bf16.msra.mxu0 0
      %1099 = vmatprep.mubr.bf16.mxu0 %v1065
      %1100 = vmatmul.mubr.bf16.gmra.mrb[0].mxu0 %v1061
      %v1101 = vpop.f32.mrb[0].mxu0
      %v1102 = vadd.f32 %v1049, %v1101
      %v1103 = vpop.f32.mrb[0].mxu0
      %v1104 = vadd.f32 %v1049, %v1103
      %v1105 = vpop.f32.mrb[0].mxu0
      %v1106 = vadd.f32 %v1053, %v1105
      %v1107 = vpop.f32.mrb[0].mxu0
      %v1108 = vadd.f32 %v1053, %v1107
      %1109 = vdwg.mxu0
      %v1110 = vld [vmem:[%s6] sm:$0xf]
      %v1111 = vld [vmem:[%s6 + $0x4] sm:$0xf]
      %v1112 = vadd.f32 %v720, %v721
      %1113 = vadd.xlane.f32.xlu0 %v1112
      %v1114 = vpop.xlane.xlu0 %1113
      %v1115 = vadd.f32 %v722, %v723
      %1116 = vadd.xlane.f32.xlu0 %v1115
      %v1117 = vpop.xlane.xlu0 %1116
      %v1118 = vmul.f32 %v1114, %v673
      %v1119 = vmul.f32 %v1117, %v673
      %v1120 = vadd.f32 %v1102, %v1104
      %1121 = vadd.xlane.f32.xlu0 %v1120
      %v1122 = vpop.xlane.xlu0 %1121
      %v1123 = vadd.f32 %v1106, %v1108
      %1124 = vadd.xlane.f32.xlu0 %v1123
      %v1125 = vpop.xlane.xlu0 %1124
      %v1126 = vmul.f32 %v1122, %v673
      %v1127 = vmul.f32 %v1125, %v673
      %v1128 = vsel %vm846, %v1118, %v1126
      %v1129 = vsel %vm846, %v1119, %v1127
      %v1132 = vunpack.c.l.b16 %v1110
      %v1133 = vunpack.c.l.b16 %v1111
      %v1134 = vpack.c.b16 %v1133, %v1132
      %v1136 = vsel %vm397, %v1134, 0
      %1138 = vmatprep.subr.mxu0 0.0
      %1139 = vmatpush1.msra.mxu0 %v1128
      %1140 = vmatprep.subr.mxu0 0.0
      %1141 = vmatpush1.msra.mxu0 %v1129
      %1142 = vmatprep.subr.mxu0 0.0
      %1143 = vmatpush1.msra.mxu0 0.0
      %1144 = vmatprep.subr.mxu0 0.0
      %1145 = vmatpush1.msra.mxu0 0.0
      %1146 = vmatprep.subr.mxu0 0.0
      %1147 = vmatpush1.msra.mxu0 0.0
      %1148 = vmatprep.subr.mxu0 0.0
      %1149 = vmatpush1.msra.mxu0 0.0
      %1150 = vmatprep.subr.mxu0 0.0
      %1151 = vmatpush1.msra.mxu0 0.0
      %1152 = vmatprep.subr.mxu0 0.0
      %1153 = vmatpush1.msra.mxu0 0.0
      %1154 = vmatprep.subr.mxu0 0.0
      %1155 = vmatpush1.msra.mxu0 0.0
      %1156 = vmatprep.subr.mxu0 0.0
      %1157 = vmatpush1.msra.mxu0 0.0
      %1158 = vmatprep.subr.mxu0 0.0
      %1159 = vmatpush1.msra.mxu0 0.0
      %1160 = vmatprep.subr.mxu0 0.0
      %1161 = vmatpush1.msra.mxu0 0.0
      %1162 = vmatprep.subr.mxu0 0.0
      %1163 = vmatpush1.msra.mxu0 0.0
      %1164 = vmatprep.subr.mxu0 0.0
      %1165 = vmatpush1.msra.mxu0 0.0
      %1166 = vmatprep.subr.mxu0 0.0
      %1167 = vmatpush1.msra.mxu0 0.0
      %1168 = vmatprep.subr.mxu0 0.0
      %1169 = vmatpush1.msra.mxu0 0.0
      %1170 = vmatprep.subr.mxu0 0.0
      %1171 = vmatpush1.msra.mxu0 0.0
      %1172 = vmatprep.subr.mxu0 0.0
      %1173 = vmatpush1.msra.mxu0 0.0
      %1174 = vmatprep.subr.mxu0 0.0
      %1175 = vmatpush1.msra.mxu0 0.0
      %1176 = vmatprep.subr.mxu0 0.0
      %1177 = vmatpush1.msra.mxu0 0.0
      %1178 = vmatprep.subr.mxu0 0.0
      %1179 = vmatpush1.msra.mxu0 0.0
      %1180 = vmatprep.subr.mxu0 0.0
      %1181 = vmatpush1.msra.mxu0 0.0
      %1182 = vmatprep.subr.mxu0 0.0
      %1183 = vmatpush1.msra.mxu0 0.0
      %1184 = vmatprep.subr.mxu0 0.0
      %1185 = vmatpush1.msra.mxu0 0.0
      %1186 = vmatprep.subr.mxu0 0.0
      %1187 = vmatpush1.msra.mxu0 0.0
      %1188 = vmatprep.subr.mxu0 0.0
      %1189 = vmatpush1.msra.mxu0 0.0
      %1190 = vmatprep.subr.mxu0 0.0
      %1191 = vmatpush1.msra.mxu0 0.0
      %1192 = vmatprep.subr.mxu0 0.0
      %1193 = vmatpush1.msra.mxu0 0.0
      %1194 = vmatprep.subr.mxu0 0.0
      %1195 = vmatpush1.msra.mxu0 0.0
      %1196 = vmatprep.subr.mxu0 0.0
      %1197 = vmatpush1.msra.mxu0 0.0
      %1198 = vmatprep.subr.mxu0 0.0
      %1199 = vmatpush1.msra.mxu0 0.0
      %1200 = vmatprep.subr.mxu0 0.0
      %1201 = vmatpush1.msra.mxu0 0.0
      %1202 = vmatprep.mubr.bf16.mxu0 0
      %1203 = vmatmul.mubr.bf16.gmra.mrb[0].mxu0 %v1136
      %v1204 = vpop.f32.mrb[0].mxu0
      %v1205 = vadd.f32 0.0, %v1204
      %v1206 = vpop.f32.mrb[0].mxu0
      %v1207 = vpop.f32.mrb[0].mxu0
      %v1208 = vadd.f32 0.0, %v1207
      %v1209 = vpop.f32.mrb[0].mxu0
      %1210 = vdwg.mxu0
      %v1211 = vmul.f32 %v1205, 0.25
      %v1212 = vmul.f32 %v1208, 0.25
      %v1213 = vsub.f32 %v1128, %v1211
      %v1214 = vsub.f32 %v1129, %v1212
      %v1215 = vmul.f32 %v1213, 1.442695
      %v1216 = vpow.pop %v1215
      %v1217 = vmul.f32 %v1214, 1.442695
      %v1218 = vpow.pop %v1217
      %1219 = vmatprep.subr.mxu0 0.0
      %1220 = vmatpush1.msra.mxu0 %v1216
      %1221 = vmatprep.subr.mxu0 0.0
      %1222 = vmatpush1.msra.mxu0 %v1218
      %1223 = vmatprep.subr.mxu0 0.0
      %1224 = vmatpush1.msra.mxu0 0.0
      %1225 = vmatprep.subr.mxu0 0.0
      %1226 = vmatpush1.msra.mxu0 0.0
      %1227 = vmatprep.subr.mxu0 0.0
      %1228 = vmatpush1.msra.mxu0 0.0
      %1229 = vmatprep.subr.mxu0 0.0
      %1230 = vmatpush1.msra.mxu0 0.0
      %1231 = vmatprep.subr.mxu0 0.0
      %1232 = vmatpush1.msra.mxu0 0.0
      %1233 = vmatprep.subr.mxu0 0.0
      %1234 = vmatpush1.msra.mxu0 0.0
      %1235 = vmatprep.subr.mxu0 0.0
      %1236 = vmatpush1.msra.mxu0 0.0
      %1237 = vmatprep.subr.mxu0 0.0
      %1238 = vmatpush1.msra.mxu0 0.0
      %1239 = vmatprep.subr.mxu0 0.0
      %1240 = vmatpush1.msra.mxu0 0.0
      %1241 = vmatprep.subr.mxu0 0.0
      %1242 = vmatpush1.msra.mxu0 0.0
      %1243 = vmatprep.subr.mxu0 0.0
      %1244 = vmatpush1.msra.mxu0 0.0
      %1245 = vmatprep.subr.mxu0 0.0
      %1246 = vmatpush1.msra.mxu0 0.0
      %1247 = vmatprep.subr.mxu0 0.0
      %1248 = vmatpush1.msra.mxu0 0.0
      %1249 = vmatprep.subr.mxu0 0.0
      %1250 = vmatpush1.msra.mxu0 0.0
      %1251 = vmatprep.subr.mxu0 0.0
      %1252 = vmatpush1.msra.mxu0 0.0
      %1253 = vmatprep.subr.mxu0 0.0
      %1254 = vmatpush1.msra.mxu0 0.0
      %1255 = vmatprep.subr.mxu0 0.0
      %1256 = vmatpush1.msra.mxu0 0.0
      %1257 = vmatprep.subr.mxu0 0.0
      %1258 = vmatpush1.msra.mxu0 0.0
      %1259 = vmatprep.subr.mxu0 0.0
      %1260 = vmatpush1.msra.mxu0 0.0
      %1261 = vmatprep.subr.mxu0 0.0
      %1262 = vmatpush1.msra.mxu0 0.0
      %1263 = vmatprep.subr.mxu0 0.0
      %1264 = vmatpush1.msra.mxu0 0.0
      %1265 = vmatprep.subr.mxu0 0.0
      %1266 = vmatpush1.msra.mxu0 0.0
      %1267 = vmatprep.subr.mxu0 0.0
      %1268 = vmatpush1.msra.mxu0 0.0
      %1269 = vmatprep.subr.mxu0 0.0
      %1270 = vmatpush1.msra.mxu0 0.0
      %1271 = vmatprep.subr.mxu0 0.0
      %1272 = vmatpush1.msra.mxu0 0.0
      %1273 = vmatprep.subr.mxu0 0.0
      %1274 = vmatpush1.msra.mxu0 0.0
      %1275 = vmatprep.subr.mxu0 0.0
      %1276 = vmatpush1.msra.mxu0 0.0
      %1277 = vmatprep.subr.mxu0 0.0
      %1278 = vmatpush1.msra.mxu0 0.0
      %1279 = vmatprep.subr.mxu0 0.0
      %1280 = vmatpush1.msra.mxu0 0.0
      %1281 = vmatprep.subr.mxu0 0.0
      %1282 = vmatpush1.msra.mxu0 0.0
      %1283 = vmatprep.mubr.bf16.mxu0 0
      %1284 = vmatmul.mubr.bf16.gmra.mrb[0].mxu0 %v1136
      %v1285 = vpop.f32.mrb[0].mxu0
      %v1286 = vadd.f32 0.0, %v1285
      %v1287 = vpop.f32.mrb[0].mxu0
      %v1288 = vpop.f32.mrb[0].mxu0
      %v1289 = vadd.f32 0.0, %v1288
      %v1290 = vpop.f32.mrb[0].mxu0
      %1291 = vdwg.mxu0
      %v1292 = vrcp.pop %v1286
      %v1293 = vmul.f32 %v1216, %v1292
      %v1294 = vrcp.pop %v1289
      %v1295 = vmul.f32 %v1218, %v1294
      %1297 = vset.pattern.permute.xlu0 0
      %1298 = vperm.xlu0 %1297, %v1293
      %v1299 = vpop.permute.xlu0 %1298
      %1302 = vset.pattern.permute.xlu0 0
      %1303 = vperm.xlu0 %1302, %v1295
      %v1304 = vpop.permute.xlu0 %1303
      %v1306 = vmul.f32 %v1299, %v1102
      %v1307 = vmul.f32 %v1299, %v1104
      %v1308 = vmul.f32 %v1304, %v1106
      %v1309 = vmul.f32 %v1304, %v1108
      %1310 = vset.pattern.permute.xlu0 1
      %1311 = vperm.xlu0 %1310, %v1293
      %v1312 = vpop.permute.xlu0 %1311
      %1314 = vset.pattern.permute.xlu0 1
      %1315 = vperm.xlu0 %1314, %v1295
      %v1316 = vpop.permute.xlu0 %1315
      %v1318 = vmul.f32 %v1312, %v720
      %v1319 = vmul.f32 %v1312, %v721
      %v1320 = vmul.f32 %v1316, %v722
      %v1321 = vmul.f32 %v1316, %v723
      %v1322 = vadd.f32 %v1306, %v1318
      %v1323 = vadd.f32 %v1307, %v1319
      %v1324 = vadd.f32 %v1308, %v1320
      %v1325 = vadd.f32 %v1309, %v1321
      %v1326 = vpack.c.bf16 %v1324, %v1322
      %v1327 = vpack.c.bf16 %v1325, %v1323
      %1328 = vmatprep.subr.bf16.mxu0 %v1327
      %1329 = vmatpush1.bf16.msra.mxu0 %v1326
      %1330 = vmatprep.subr.bf16.mxu0 0
      %1331 = vmatpush1.bf16.msra.mxu0 0
      %1332 = vmatprep.subr.bf16.mxu0 0
      %1333 = vmatpush1.bf16.msra.mxu0 0
      %1334 = vmatprep.subr.bf16.mxu0 0
      %1335 = vmatpush1.bf16.msra.mxu0 0
      %1336 = vmatprep.subr.bf16.mxu0 0
      %1337 = vmatpush1.bf16.msra.mxu0 0
      %1338 = vmatprep.subr.bf16.mxu0 0
      %1339 = vmatpush1.bf16.msra.mxu0 0
      %1340 = vmatprep.subr.bf16.mxu0 0
      %1341 = vmatpush1.bf16.msra.mxu0 0
      %1342 = vmatprep.subr.bf16.mxu0 0
      %1343 = vmatpush1.bf16.msra.mxu0 0
      %1344 = vmatprep.subr.bf16.mxu0 0
      %1345 = vmatpush1.bf16.msra.mxu0 0
      %1346 = vmatprep.subr.bf16.mxu0 0
      %1347 = vmatpush1.bf16.msra.mxu0 0
      %1348 = vmatprep.subr.bf16.mxu0 0
      %1349 = vmatpush1.bf16.msra.mxu0 0
      %1350 = vmatprep.subr.bf16.mxu0 0
      %1351 = vmatpush1.bf16.msra.mxu0 0
      %1352 = vmatprep.subr.bf16.mxu0 0
      %1353 = vmatpush1.bf16.msra.mxu0 0
      %1354 = vmatprep.subr.bf16.mxu0 0
      %1355 = vmatpush1.bf16.msra.mxu0 0
      %1356 = vmatprep.subr.bf16.mxu0 0
      %1357 = vmatpush1.bf16.msra.mxu0 0
      %1358 = vmatprep.subr.bf16.mxu0 0
      %1359 = vmatpush1.bf16.msra.mxu0 0
      %1360 = vmatprep.mubr.bf16.mxu0 0
      %1361 = vmatmul.mubr.bf16.gmra.mrb[0].mxu0 %v1136
      %v1362 = vpop.f32.mrb[0].mxu0
      %v1363 = vadd.f32 0.0, %v1362
      %v1364 = vpop.f32.mrb[0].mxu0
      %v1365 = vadd.f32 0.0, %v1364
      %v1366 = vpop.f32.mrb[0].mxu0
      %v1367 = vadd.f32 0.0, %v1366
      %v1368 = vpop.f32.mrb[0].mxu0
      %v1369 = vadd.f32 0.0, %v1368
      %1370 = vdwg.mxu0
      %v1371 = vxor.u32 %v1363, 2147483648
      %v1372 = vxor.u32 %v1365, 2147483648
      %v1373 = vxor.u32 %v1367, 2147483648
      %v1374 = vxor.u32 %v1369, 2147483648
      %v1375 = vmul.f32 %v1371, 1.442695
      %v1376 = vpow.pop %v1375
      %v1377 = vmul.f32 %v1372, 1.442695
      %v1378 = vpow.pop %v1377
      %v1379 = vmul.f32 %v1373, 1.442695
      %v1380 = vpow.pop %v1379
      %v1381 = vmul.f32 %v1374, 1.442695
      %v1382 = vpow.pop %v1381
      %v1383 = vadd.f32 %v1376, 1.0
      %v1384 = vadd.f32 %v1378, 1.0
      %v1385 = vadd.f32 %v1380, 1.0
      %v1386 = vadd.f32 %v1382, 1.0
      %v1387 = vrcp.pop %v1383
      %v1388 = vmul.f32 1.0, %v1387
      %v1389 = vrcp.pop %v1384
      %v1390 = vmul.f32 1.0, %v1389
      %v1391 = vrcp.pop %v1385
      %v1392 = vmul.f32 1.0, %v1391
      %v1393 = vrcp.pop %v1386
      %v1394 = vmul.f32 1.0, %v1393
      %v1395 = vmul.f32 %v288, %v1388
      %v1396 = vmul.f32 %v289, %v1390
      %v1397 = vmul.f32 %v290, %v1392
      %v1398 = vmul.f32 %v291, %v1394
      %1399 = vst [vmem:[%s285] sm:$0xff] %v1395
      %1400 = vst [vmem:[%s285 + $0x8] sm:$0xff] %v1396
      %1401 = vst [vmem:[%s285 + $0x10] sm:$0xff] %v1397
      %1402 = vst [vmem:[%s285 + $0x18] sm:$0xff] %v1398
      %s1403 = smul.u32 2, %s18
      %p1404 = scmp.lt.s32.totalorder %s1403, 3
      %s1405 = scalar_select %p1404, %s1403, 3
      %s1406 = smul.addr %s1405, 2
      %s1407 = smul.addr %s1406, 8
      %s1408 = scalar_lea.vmem %s7, %s1407
      // Predicated region
      $region49: #{_ema_jit.1} parent=47 // pred_check
        %p1409 = pneg %p188
      $region50: #{_ema_jit.1} parent=47 // pred_check_branch
        %1411 = sbr.rel (%p1409) target = $region52
      $region51: #{_ema_jit.1} parent=47 // pred_region
        %s1412 = smul.u32 2, %s18
      $region52: #{_ema_jit.1} parent=47 // pred_fallthru
        _
    $region48: #{_ema_jit.1} parent=5 // pred_fallthru
      _
    %p1413 = scmp.le.s32.totalorder 2, %s13
    // Predicated region
    $region53: #{_ema_jit.1} parent=5 // pred_check
      %p1414 = pneg %p1413
    $region54: #{_ema_jit.1} parent=5 // pred_check_branch
      %1416 = sbr.rel (%p1414) target = $region56
    $region55: #{_ema_jit.1} parent=5 // pred_region
      %s1417 = ssub.s32 %s13, 2
      // Predicated region
      $region57: #{_ema_jit.1} parent=55 // pred_check
        %p1418 = pneg %p194
      $region58: #{_ema_jit.1} parent=55 // pred_check_branch
        %1420 = sbr.rel (%p1418) target = $region60
      $region59: #{_ema_jit.1} parent=55 // pred_region
        %s1421 = smul.u32 2, %s19
        %p1422 = scmp.lt.s32.totalorder %s1421, 3
        %s1423 = scalar_select %p1422, %s1421, 3
        %s1424 = smul.addr %s1423, 2
        %s1425 = smul.addr %s1424, 8
        %s1426 = scalar_lea.vmem %s7, %s1425
      $region60: #{_ema_jit.1} parent=55 // pred_fallthru
        _
    $region56: #{_ema_jit.1} parent=5 // pred_fallthru
      _
  $region6: #{_ema_jit.1} parent=0 // loop_footer
    %s17 = sadd.s32 1, %s13
  $region7: #{_ema_jit.1} parent=0 // loop_footer_branch
    %12 = sbr.rel target = $region3
  $region8: #{_ema_jit.1} parent=0 // loop_exit
    _

</llo_original>
